<compile_context>
chip_gen: v7x
topology: tpu7x:2x2x1
jax: 0.10.0
libtpu: 0.0.40
codegen_flags: <defaults>
</compile_context>

<pallas_src>
import numpy as np

import jax
import jax.numpy as jnp
from jax.experimental import pallas as pl
from jax.experimental.pallas import tpu as pltpu

# ----------------------------- config (small) ------------------------------
BS = 2          # batch
DOC_LEN = 16    # L  (doc_len / r_max_len)
WORD_DIM = 32   # D  (opt.word_dim)
FILTERS = 16    # F  (opt.filters_num)
KS = 3          # opt.kernel_size (DAML's unfold assumes 3)
ID_EMB = 8      # opt.id_emb_size
VOCAB = 50
USER_NUM = 10
ITEM_NUM = 10

L, D, F, ID = DOC_LEN, WORD_DIM, FILTERS, ID_EMB
NTAPS = 5 + KS - 1                      # 7 shifted D-blocks in the activation im2col
SEG = ((L + 2 + 7) // 8) * 8            # 24 rows per padded segment (8-aligned)
NSEG = 2 * BS                           # user segments then item segments
NROWS = NSEG * SEG                      # 96
LOUT = L - KS + 1                       # 14 (abs-conv output length / avg-pool width)
LW = 2 * F                              # packed-weight lane width (32)

# packed-weight row offsets inside the single (WROWS, LW) parameter slab
R_DOC = 0                               # (3D, 2F)   fused doc-conv weight
R_ABS = R_DOC + KS * D                  # (6F, 2F)   block-diag im2col abs-conv weight
R_FC = R_ABS + KS * 2 * F               # (2F, 2ID)  block-diag fc weight
R_GATE = R_FC + 2 * F                   # (7D, KS)   shifted word-conv weights
R_BIAS = R_GATE + NTAPS * D             # 4 bias rows (word, doc, abs, fc)
WROWS = ((R_BIAS + 4 + 7) // 8) * 8     # 456

assert KS == 3 and 2 * ID <= LW


# ------------------------------ Pallas kernel -------------------------------
def daml_kernel(x7_ref, wpack_ref, ared_ref, out_ref):
    f32 = jnp.float32
    X7 = x7_ref[...]                                               # (NROWS, 7D)

    # ---- word attention: one im2col matmul; col k = gate at row offset +k ----
    w_gate = wpack_ref[R_GATE:R_GATE + NTAPS * D, 0:KS]            # (7D, KS)
    word_b = wpack_ref[R_BIAS:R_BIAS + 1, 0:1]                     # (1, 1)
    gate = jax.nn.sigmoid(
        jnp.dot(X7, w_gate, preferred_element_type=f32) + word_b)  # (NROWS, KS)

    # ---- doc conv: gated shifted embeddings -> one matmul (user|item lane-fused)
    xd = jnp.concatenate(
        [X7[:, (k + 2) * D:(k + 3) * D] * gate[:, k:k + 1] for k in range(KS)],
        axis=1)                                                    # (NROWS, 3D)
    w_doc = wpack_ref[R_DOC:R_DOC + KS * D, :]                     # (3D, 2F)
    b_doc = wpack_ref[R_BIAS + 1:R_BIAS + 2, :]                    # (1, 2F)
    doc = jnp.dot(xd, w_doc, preferred_element_type=f32) + b_doc   # (NROWS, 2F)

    # ---- mutual euclidean attention (per batch element; bs is tiny) ----
    ones_1f = jnp.ones((1, F), f32)
    ones_l1 = jnp.ones((L, 1), f32)
    zpad = jnp.zeros((SEG - L, 1), f32)
    u_att, i_att = [], []
    for b in range(BS):
        du = doc[b * SEG:b * SEG + L, 0:F]                          # (L, F)
        dv = doc[(BS + b) * SEG:(BS + b) * SEG + L, F:2 * F]        # (L, F)
        g = jax.lax.dot_general(du, dv, (((1,), (1,)), ((), ())),
                                preferred_element_type=f32)         # (L, L)
        un = jnp.sum(du * du, axis=1, keepdims=True)                # (L, 1)  XLU
        vn = jax.lax.dot_general(ones_1f, dv * dv, (((1,), (1,)), ((), ())),
                                 preferred_element_type=f32)        # (1, L)
        euclid = jnp.sqrt(jnp.maximum(un + vn - 2.0 * g, 0.0))
        attn = pl.reciprocal(1.0 + euclid, approx=True)             # (L, L)  EUP
        u_att.append(jnp.sum(attn, axis=1, keepdims=True))          # (L, 1)  XLU
        i_att.append(jax.lax.dot_general(attn, ones_l1, (((0,), (0,)), ((), ())),
                                         preferred_element_type=f32))  # (L, 1)
    # per-row attention weights, zero on the padded rows of every segment
    att = jnp.concatenate(
        [piece for col in (u_att + i_att) for piece in (col, zpad)], axis=0)  # (NROWS,1)

    # ---- unfold+sum + abs_cnn + avg-pool collapsed into matmuls ----
    p = doc * att                                                   # (NROWS, 2F)
    qs = [jnp.dot(ared_ref[t], p, preferred_element_type=f32)       # (NSEG, 2F) each
          for t in range(KS)]
    qcat = jnp.concatenate(qs, axis=1)                              # (NSEG, 6F)
    w_abs = wpack_ref[R_ABS:R_ABS + KS * 2 * F, :]                  # (6F, 2F)
    b_abs = wpack_ref[R_BIAS + 2:R_BIAS + 3, :]                     # (1, 2F)
    pooled = (jnp.dot(qcat, w_abs, preferred_element_type=f32) * (1.0 / LOUT)
              + b_abs)                                              # (NSEG, 2F)

    # ---- fc + relu (block-diagonal user|item weights), single merged store ----
    w_fc = wpack_ref[R_FC:R_FC + 2 * F, 0:2 * ID]                   # (2F, 2ID)
    b_fc = wpack_ref[R_BIAS + 3:R_BIAS + 4, 0:2 * ID]               # (1, 2ID)
    out_ref[...] = jnp.maximum(
        jnp.dot(pooled, w_fc, preferred_element_type=f32) + b_fc, 0.0)  # (NSEG, 2ID)


# ------------------------------ wrapper --------------------------------------
@jax.jit
def daml_doc_features(u_emb, i_emb, wpack, ared):
    # wrapper-side layout plumbing: per-segment zero padding + 7-tap im2col (plain XLA)
    all_emb = jnp.concatenate([u_emb, i_emb], axis=0)               # (NSEG, L, D)
    pad_back = SEG + NTAPS - 1 - 3 - L
    e3 = jnp.pad(all_emb, ((0, 0), (3, pad_back), (0, 0)))          # (NSEG, SEG+6, D)
    x7 = jnp.concatenate([e3[:, m:m + SEG, :] for m in range(NTAPS)], axis=-1)
    x7 = x7.reshape(NROWS, NTAPS * D)                               # (96, 224)

    out = pl.pallas_call(
        daml_kernel,
        grid=(1,),
        in_specs=[pl.BlockSpec((NROWS, NTAPS * D), lambda i: (0, 0)),
                  pl.BlockSpec((WROWS, LW), lambda i: (0, 0)),
                  pl.BlockSpec((KS, NSEG, NROWS), lambda i: (0, 0, 0))],
        out_specs=pl.BlockSpec((NSEG, 2 * ID), lambda i: (0, 0)),
        out_shape=jax.ShapeDtypeStruct((NSEG, 2 * ID), jnp.float32),
        compiler_params=pltpu.CompilerParams(
            dimension_semantics=("arbitrary",)),
    )(x7, wpack, ared)
    # user head in lanes 0:ID of rows 0:BS, item head in lanes ID:2ID of rows BS:2BS
    return out[0:BS, 0:ID], out[BS:2 * BS, ID:2 * ID]


def daml_forward(params, uids, iids, user_doc, item_doc):
    # Embedding gathers (glue, plain JAX).
    u_emb = params["user_word_embs"][user_doc]      # (BS, L, D)
    i_emb = params["item_word_embs"][item_doc]      # (BS, L, D)

    user_doc_fea, item_doc_fea = daml_doc_features(
        u_emb, i_emb, params["wpack"], params["ared"])

    uid_emb = params["uid_embedding"][uids]         # (BS, ID)
    iid_emb = params["iid_embedding"][iids]         # (BS, ID)

    use_fea = jnp.stack([user_doc_fea, uid_emb], axis=1)    # (BS, 2, ID)
    item_fea = jnp.stack([item_doc_fea, iid_emb], axis=1)   # (BS, 2, ID)
    return use_fea, item_fea


# --------------------------- deterministic params ---------------------------
def init_params(key):
    ks = jax.random.split(key, 16)

    def xavier_conv(k, out_c, in_c, kh, kw):
        fan_in = in_c * kh * kw
        fan_out = out_c * kh * kw
        std = (2.0 / (fan_in + fan_out)) ** 0.5
        return std * jax.random.normal(k, (out_c, in_c, kh, kw), jnp.float32)

    unif = lambda k, shape: jax.random.uniform(k, shape, jnp.float32, -0.1, 0.1)

    # torch-layout raw parameters
    word_w = xavier_conv(ks[0], 1, 1, 5, D)          # (1,1,5,D)
    word_b = unif(ks[1], (1,))
    udoc_w = xavier_conv(ks[2], F, 1, KS, D)         # (F,1,3,D)
    udoc_b = unif(ks[3], (F,))
    idoc_w = xavier_conv(ks[4], F, 1, KS, D)
    idoc_b = unif(ks[5], (F,))
    uabs_w = xavier_conv(ks[6], F, 1, KS, F)         # (F,1,3,F)
    uabs_b = unif(ks[7], (F,))
    iabs_w = xavier_conv(ks[8], F, 1, KS, F)
    iabs_b = unif(ks[9], (F,))
    ufc_w = unif(ks[10], (ID, F))
    ufc_b = jnp.full((ID,), 0.1, jnp.float32)
    ifc_w = unif(ks[11], (ID, F))
    ifc_b = jnp.full((ID,), 0.1, jnp.float32)

    # ---- pack all weights/biases into one (WROWS, LW) slab (single kernel DMA) ----
    def bd(a, b_):  # block-diagonal 2x2
        top = jnp.concatenate([a, jnp.zeros((a.shape[0], b_.shape[1]), jnp.float32)], 1)
        bot = jnp.concatenate([jnp.zeros((b_.shape[0], a.shape[1]), jnp.float32), b_], 1)
        return jnp.concatenate([top, bot], 0)

    w_doc = jnp.concatenate(
        [jnp.concatenate([udoc_w[:, 0, k, :].T, idoc_w[:, 0, k, :].T], axis=1)
         for k in range(KS)], axis=0)                                  # (3D, 2F)
    w_abs = jnp.concatenate(
        [bd(uabs_w[:, 0, t, :].T, iabs_w[:, 0, t, :].T) for t in range(KS)],
        axis=0)                                                        # (6F, 2F)
    w_fc = bd(ufc_w.T, ifc_w.T)                                        # (2F, 2ID)

    w_word_flat = word_w[0, 0].reshape(5 * D)                          # (5D,)
    w_gate = jnp.zeros((NTAPS * D, KS), jnp.float32)
    for j in range(KS):                                                # shifted copies
        w_gate = w_gate.at[j * D:(j + 5) * D, j].set(w_word_flat)

    wpack = jnp.zeros((WROWS, LW), jnp.float32)
    wpack = wpack.at[R_DOC:R_DOC + KS * D, :].set(w_doc)
    wpack = wpack.at[R_ABS:R_ABS + KS * 2 * F, :].set(w_abs)
    wpack = wpack.at[R_FC:R_FC + 2 * F, 0:2 * ID].set(w_fc)
    wpack = wpack.at[R_GATE:R_GATE + NTAPS * D, 0:KS].set(w_gate)
    wpack = wpack.at[R_BIAS, 0].set(word_b[0])
    wpack = wpack.at[R_BIAS + 1, :].set(jnp.concatenate([udoc_b, idoc_b]))
    wpack = wpack.at[R_BIAS + 2, :].set(jnp.concatenate([uabs_b, iabs_b]))
    wpack = wpack.at[R_BIAS + 3, 0:2 * ID].set(jnp.concatenate([ufc_b, ifc_b]))

    # count matrices that fold unfold(3)+sum, the 3 abs-conv taps and avg-pool
    # into three (NSEG, NROWS) reductions (pure constants of L/SEG/NSEG)
    a = np.zeros((KS, NSEG, NROWS), np.float32)
    for t in range(KS):
        for i in range(L):
            lo, hi = max(t, i - 1), min(t + LOUT - 1, i + 1)
            cnt = max(0, hi - lo + 1)
            for s in range(NSEG):
                a[t, s, s * SEG + i] = cnt
    ared = jnp.asarray(a)

    params = dict(
        wpack=wpack, ared=ared,
        uid_embedding=unif(ks[12], (USER_NUM + 2, ID)),
        iid_embedding=unif(ks[13], (ITEM_NUM + 2, ID)),
        # the reference copies the SAME pretrained w2v table into both embeddings;
        # synthetic deterministic stand-in here (no file I/O)
        user_word_embs=0.1 * jax.random.normal(ks[14], (VOCAB, D), jnp.float32),
        item_word_embs=0.1 * jax.random.normal(ks[14], (VOCAB, D), jnp.float32),
    )
    return params


if __name__ == "__main__":
    key = jax.random.PRNGKey(0)
    k_par, k_ud, k_id, k_u, k_i = jax.random.split(key, 5)

    params = init_params(k_par)

    user_doc = jax.random.randint(k_ud, (BS, DOC_LEN), 0, VOCAB, dtype=jnp.int32)
    item_doc = jax.random.randint(k_id, (BS, DOC_LEN), 0, VOCAB, dtype=jnp.int32)
    uids = jax.random.randint(k_u, (BS,), 0, USER_NUM, dtype=jnp.int32)
    iids = jax.random.randint(k_i, (BS,), 0, ITEM_NUM, dtype=jnp.int32)

    use_fea, item_fea = daml_forward(params, uids, iids, user_doc, item_doc)
    jax.block_until_ready((use_fea, item_fea))

    assert use_fea.shape == (BS, 2, ID_EMB), use_fea.shape
    assert item_fea.shape == (BS, 2, ID_EMB), item_fea.shape
    assert bool(jnp.all(jnp.isfinite(use_fea))) and bool(jnp.all(jnp.isfinite(item_fea)))
    print("KERNEL_OK")
</pallas_src>

<mosaic_0001>
module attributes {stable_mosaic.version = 11 : i64} {
  func.func @daml_kernel(%arg0: i32, %arg1: memref<96x224xf32, #tpu.memory_space<vmem>>, %arg2: memref<456x32xf32, #tpu.memory_space<vmem>>, %arg3: memref<3x4x96xf32, #tpu.memory_space<vmem>>, %arg4: memref<4x16xf32, #tpu.memory_space<vmem>>) attributes {dimension_semantics = [#tpu.dimension_semantics<arbitrary>], iteration_bounds = array<i64: 1>, scalar_prefetch = 0 : i64, scratch_operands = 0 : i64, tpu.core_type = #tpu.core_type<tc>, window_params = [{pipeline_mode = #tpu.pipeline_mode<synchronous>, transform_indices = @transform_0, window_bounds = array<i64: 96, 224>}, {pipeline_mode = #tpu.pipeline_mode<synchronous>, transform_indices = @transform_1, window_bounds = array<i64: 456, 32>}, {pipeline_mode = #tpu.pipeline_mode<synchronous>, transform_indices = @transform_2, window_bounds = array<i64: 3, 4, 96>}, {pipeline_mode = #tpu.pipeline_mode<synchronous>, transform_indices = @transform_3, window_bounds = array<i64: 4, 16>}]} {
    %c0 = arith.constant 0 : index
    %c0_0 = arith.constant 0 : index
    %0 = vector.load %arg1[%c0, %c0_0] : memref<96x224xf32, #tpu.memory_space<vmem>>, vector<96x224xf32>
    %c224 = arith.constant 224 : index
    %c0_1 = arith.constant 0 : index
    %1 = vector.load %arg2[%c224, %c0_1] : memref<456x32xf32, #tpu.memory_space<vmem>>, vector<224x3xf32>
    %c448 = arith.constant 448 : index
    %c0_2 = arith.constant 0 : index
    %2 = vector.load %arg2[%c448, %c0_2] : memref<456x32xf32, #tpu.memory_space<vmem>>, vector<1x1xf32>
    %cst = arith.constant dense<0.000000e+00> : vector<96x3xf32>
    %3 = tpu.matmul %0, %1, %cst {dimension_numbers = #tpu.dot_dimension_numbers<[1], [0], [0], [1], [0, 0, 1, 1], [], []>} : vector<96x224xf32>, vector<224x3xf32>, vector<96x3xf32> -> vector<96x3xf32>
    %4 = vector.broadcast %2 : vector<1x1xf32> to vector<96x3xf32>
    %5 = arith.addf %3, %4 : vector<96x3xf32>
    %6 = arith.negf %5 : vector<96x3xf32>
    %7 = math.exp %6 : vector<96x3xf32>
    %cst_3 = arith.constant 1.000000e+00 : f32
    %8 = vector.broadcast %cst_3 : f32 to vector<96x3xf32>
    %9 = arith.addf %8, %7 : vector<96x3xf32>
    %10 = arith.divf %8, %9 : vector<96x3xf32>
    %11 = vector.extract_strided_slice %0 {offsets = [0, 64], sizes = [96, 32], strides = [1, 1]} : vector<96x224xf32> to vector<96x32xf32>
    %12 = vector.extract_strided_slice %10 {offsets = [0, 0], sizes = [96, 1], strides = [1, 1]} : vector<96x3xf32> to vector<96x1xf32>
    %13 = vector.broadcast %12 : vector<96x1xf32> to vector<96x32xf32>
    %14 = arith.mulf %11, %13 : vector<96x32xf32>
    %15 = vector.extract_strided_slice %0 {offsets = [0, 96], sizes = [96, 32], strides = [1, 1]} : vector<96x224xf32> to vector<96x32xf32>
    %16 = vector.extract_strided_slice %10 {offsets = [0, 1], sizes = [96, 1], strides = [1, 1]} : vector<96x3xf32> to vector<96x1xf32>
    %17 = vector.broadcast %16 : vector<96x1xf32> to vector<96x32xf32>
    %18 = arith.mulf %15, %17 : vector<96x32xf32>
    %19 = vector.extract_strided_slice %0 {offsets = [0, 128], sizes = [96, 32], strides = [1, 1]} : vector<96x224xf32> to vector<96x32xf32>
    %20 = vector.extract_strided_slice %10 {offsets = [0, 2], sizes = [96, 1], strides = [1, 1]} : vector<96x3xf32> to vector<96x1xf32>
    %21 = vector.broadcast %20 : vector<96x1xf32> to vector<96x32xf32>
    %22 = arith.mulf %19, %21 : vector<96x32xf32>
    %23 = tpu.concatenate %14, %18, %22 in 1 : vector<96x32xf32>, vector<96x32xf32>, vector<96x32xf32> -> vector<96x96xf32>
    %c0_4 = arith.constant 0 : index
    %c0_5 = arith.constant 0 : index
    %24 = vector.load %arg2[%c0_4, %c0_5] : memref<456x32xf32, #tpu.memory_space<vmem>>, vector<96x32xf32>
    %c449 = arith.constant 449 : index
    %c0_6 = arith.constant 0 : index
    %25 = vector.load %arg2[%c449, %c0_6] : memref<456x32xf32, #tpu.memory_space<vmem>>, vector<1x32xf32>
    %cst_7 = arith.constant dense<0.000000e+00> : vector<96x32xf32>
    %26 = tpu.matmul %23, %24, %cst_7 {dimension_numbers = #tpu.dot_dimension_numbers<[1], [0], [0], [1], [0, 0, 1, 1], [], []>} : vector<96x96xf32>, vector<96x32xf32>, vector<96x32xf32> -> vector<96x32xf32>
    %27 = vector.broadcast %25 : vector<1x32xf32> to vector<96x32xf32>
    %28 = arith.addf %26, %27 : vector<96x32xf32>
    %cst_8 = arith.constant 1.000000e+00 : f32
    %29 = vector.broadcast %cst_8 : f32 to vector<1x16xf32>
    %cst_9 = arith.constant 1.000000e+00 : f32
    %30 = vector.broadcast %cst_9 : f32 to vector<16x1xf32>
    %cst_10 = arith.constant 0.000000e+00 : f32
    %31 = vector.broadcast %cst_10 : f32 to vector<8x1xf32>
    %32 = vector.extract_strided_slice %28 {offsets = [0, 0], sizes = [16, 16], strides = [1, 1]} : vector<96x32xf32> to vector<16x16xf32>
    %33 = vector.extract_strided_slice %28 {offsets = [48, 16], sizes = [16, 16], strides = [1, 1]} : vector<96x32xf32> to vector<16x16xf32>
    %cst_11 = arith.constant dense<0.000000e+00> : vector<16x16xf32>
    %34 = tpu.matmul %32, %33, %cst_11 {dimension_numbers = #tpu.dot_dimension_numbers<[1], [1], [0], [0], [0, 0, 1, 0], [], []>} : vector<16x16xf32>, vector<16x16xf32>, vector<16x16xf32> -> vector<16x16xf32>
    %35 = arith.mulf %32, %32 : vector<16x16xf32>
    %cst_12 = arith.constant dense<0.000000e+00> : vector<16xf32>
    %36 = vector.multi_reduction <add>, %35, %cst_12 [1] : vector<16x16xf32> to vector<16xf32>
    %37 = vector.shape_cast %36 : vector<16xf32> to vector<16x1xf32>
    %38 = arith.mulf %33, %33 : vector<16x16xf32>
    %cst_13 = arith.constant dense<0.000000e+00> : vector<1x16xf32>
    %39 = tpu.matmul %29, %38, %cst_13 {dimension_numbers = #tpu.dot_dimension_numbers<[1], [1], [0], [0], [0, 0, 1, 0], [], []>} : vector<1x16xf32>, vector<16x16xf32>, vector<1x16xf32> -> vector<1x16xf32>
    %40 = vector.broadcast %37 : vector<16x1xf32> to vector<16x16xf32>
    %41 = vector.broadcast %39 : vector<1x16xf32> to vector<16x16xf32>
    %42 = arith.addf %40, %41 : vector<16x16xf32>
    %cst_14 = arith.constant 2.000000e+00 : f32
    %43 = vector.broadcast %cst_14 : f32 to vector<16x16xf32>
    %44 = arith.mulf %43, %34 : vector<16x16xf32>
    %45 = arith.subf %42, %44 : vector<16x16xf32>
    %cst_15 = arith.constant 0.000000e+00 : f32
    %46 = vector.broadcast %cst_15 : f32 to vector<16x16xf32>
    %47 = arith.maximumf %45, %46 : vector<16x16xf32>
    %48 = math.sqrt %47 : vector<16x16xf32>
    %cst_16 = arith.constant 1.000000e+00 : f32
    %49 = vector.broadcast %cst_16 : f32 to vector<16x16xf32>
    %50 = arith.addf %49, %48 : vector<16x16xf32>
    %51 = tpu.reciprocal %50 {approx = true} : vector<16x16xf32> -> vector<16x16xf32>
    %cst_17 = arith.constant dense<0.000000e+00> : vector<16xf32>
    %52 = vector.multi_reduction <add>, %51, %cst_17 [1] : vector<16x16xf32> to vector<16xf32>
    %53 = vector.shape_cast %52 : vector<16xf32> to vector<16x1xf32>
    %cst_18 = arith.constant dense<0.000000e+00> : vector<16x1xf32>
    %54 = tpu.matmul %51, %30, %cst_18 {dimension_numbers = #tpu.dot_dimension_numbers<[0], [0], [1], [1], [0, 1, 1, 1], [], []>} : vector<16x16xf32>, vector<16x1xf32>, vector<16x1xf32> -> vector<16x1xf32>
    %55 = vector.extract_strided_slice %28 {offsets = [24, 0], sizes = [16, 16], strides = [1, 1]} : vector<96x32xf32> to vector<16x16xf32>
    %56 = vector.extract_strided_slice %28 {offsets = [72, 16], sizes = [16, 16], strides = [1, 1]} : vector<96x32xf32> to vector<16x16xf32>
    %cst_19 = arith.constant dense<0.000000e+00> : vector<16x16xf32>
    %57 = tpu.matmul %55, %56, %cst_19 {dimension_numbers = #tpu.dot_dimension_numbers<[1], [1], [0], [0], [0, 0, 1, 0], [], []>} : vector<16x16xf32>, vector<16x16xf32>, vector<16x16xf32> -> vector<16x16xf32>
    %58 = arith.mulf %55, %55 : vector<16x16xf32>
    %cst_20 = arith.constant dense<0.000000e+00> : vector<16xf32>
    %59 = vector.multi_reduction <add>, %58, %cst_20 [1] : vector<16x16xf32> to vector<16xf32>
    %60 = vector.shape_cast %59 : vector<16xf32> to vector<16x1xf32>
    %61 = arith.mulf %56, %56 : vector<16x16xf32>
    %cst_21 = arith.constant dense<0.000000e+00> : vector<1x16xf32>
    %62 = tpu.matmul %29, %61, %cst_21 {dimension_numbers = #tpu.dot_dimension_numbers<[1], [1], [0], [0], [0, 0, 1, 0], [], []>} : vector<1x16xf32>, vector<16x16xf32>, vector<1x16xf32> -> vector<1x16xf32>
    %63 = vector.broadcast %60 : vector<16x1xf32> to vector<16x16xf32>
    %64 = vector.broadcast %62 : vector<1x16xf32> to vector<16x16xf32>
    %65 = arith.addf %63, %64 : vector<16x16xf32>
    %cst_22 = arith.constant 2.000000e+00 : f32
    %66 = vector.broadcast %cst_22 : f32 to vector<16x16xf32>
    %67 = arith.mulf %66, %57 : vector<16x16xf32>
    %68 = arith.subf %65, %67 : vector<16x16xf32>
    %cst_23 = arith.constant 0.000000e+00 : f32
    %69 = vector.broadcast %cst_23 : f32 to vector<16x16xf32>
    %70 = arith.maximumf %68, %69 : vector<16x16xf32>
    %71 = math.sqrt %70 : vector<16x16xf32>
    %cst_24 = arith.constant 1.000000e+00 : f32
    %72 = vector.broadcast %cst_24 : f32 to vector<16x16xf32>
    %73 = arith.addf %72, %71 : vector<16x16xf32>
    %74 = tpu.reciprocal %73 {approx = true} : vector<16x16xf32> -> vector<16x16xf32>
    %cst_25 = arith.constant dense<0.000000e+00> : vector<16xf32>
    %75 = vector.multi_reduction <add>, %74, %cst_25 [1] : vector<16x16xf32> to vector<16xf32>
    %76 = vector.shape_cast %75 : vector<16xf32> to vector<16x1xf32>
    %cst_26 = arith.constant dense<0.000000e+00> : vector<16x1xf32>
    %77 = tpu.matmul %74, %30, %cst_26 {dimension_numbers = #tpu.dot_dimension_numbers<[0], [0], [1], [1], [0, 1, 1, 1], [], []>} : vector<16x16xf32>, vector<16x1xf32>, vector<16x1xf32> -> vector<16x1xf32>
    %78 = tpu.concatenate %53, %31, %76, %31, %54, %31, %77, %31 in 0 : vector<16x1xf32>, vector<8x1xf32>, vector<16x1xf32>, vector<8x1xf32>, vector<16x1xf32>, vector<8x1xf32>, vector<16x1xf32>, vector<8x1xf32> -> vector<96x1xf32>
    %79 = vector.broadcast %78 : vector<96x1xf32> to vector<96x32xf32>
    %80 = arith.mulf %28, %79 : vector<96x32xf32>
    %c0_27 = arith.constant 0 : index
    %c0_28 = arith.constant 0 : index
    %c0_29 = arith.constant 0 : index
    %81 = vector.load %arg3[%c0_27, %c0_28, %c0_29] : memref<3x4x96xf32, #tpu.memory_space<vmem>>, vector<1x4x96xf32>
    %82 = vector.shape_cast %81 : vector<1x4x96xf32> to vector<4x96xf32>
    %cst_30 = arith.constant dense<0.000000e+00> : vector<4x32xf32>
    %83 = tpu.matmul %82, %80, %cst_30 {dimension_numbers = #tpu.dot_dimension_numbers<[1], [0], [0], [1], [0, 0, 1, 1], [], []>} : vector<4x96xf32>, vector<96x32xf32>, vector<4x32xf32> -> vector<4x32xf32>
    %c1 = arith.constant 1 : index
    %c0_31 = arith.constant 0 : index
    %c0_32 = arith.constant 0 : index
    %84 = vector.load %arg3[%c1, %c0_31, %c0_32] : memref<3x4x96xf32, #tpu.memory_space<vmem>>, vector<1x4x96xf32>
    %85 = vector.shape_cast %84 : vector<1x4x96xf32> to vector<4x96xf32>
    %cst_33 = arith.constant dense<0.000000e+00> : vector<4x32xf32>
    %86 = tpu.matmul %85, %80, %cst_33 {dimension_numbers = #tpu.dot_dimension_numbers<[1], [0], [0], [1], [0, 0, 1, 1], [], []>} : vector<4x96xf32>, vector<96x32xf32>, vector<4x32xf32> -> vector<4x32xf32>
    %c2 = arith.constant 2 : index
    %c0_34 = arith.constant 0 : index
    %c0_35 = arith.constant 0 : index
    %87 = vector.load %arg3[%c2, %c0_34, %c0_35] : memref<3x4x96xf32, #tpu.memory_space<vmem>>, vector<1x4x96xf32>
    %88 = vector.shape_cast %87 : vector<1x4x96xf32> to vector<4x96xf32>
    %cst_36 = arith.constant dense<0.000000e+00> : vector<4x32xf32>
    %89 = tpu.matmul %88, %80, %cst_36 {dimension_numbers = #tpu.dot_dimension_numbers<[1], [0], [0], [1], [0, 0, 1, 1], [], []>} : vector<4x96xf32>, vector<96x32xf32>, vector<4x32xf32> -> vector<4x32xf32>
    %90 = tpu.concatenate %83, %86, %89 in 1 : vector<4x32xf32>, vector<4x32xf32>, vector<4x32xf32> -> vector<4x96xf32>
    %c96 = arith.constant 96 : index
    %c0_37 = arith.constant 0 : index
    %91 = vector.load %arg2[%c96, %c0_37] : memref<456x32xf32, #tpu.memory_space<vmem>>, vector<96x32xf32>
    %c450 = arith.constant 450 : index
    %c0_38 = arith.constant 0 : index
    %92 = vector.load %arg2[%c450, %c0_38] : memref<456x32xf32, #tpu.memory_space<vmem>>, vector<1x32xf32>
    %cst_39 = arith.constant dense<0.000000e+00> : vector<4x32xf32>
    %93 = tpu.matmul %90, %91, %cst_39 {dimension_numbers = #tpu.dot_dimension_numbers<[1], [0], [0], [1], [0, 0, 1, 1], [], []>} : vector<4x96xf32>, vector<96x32xf32>, vector<4x32xf32> -> vector<4x32xf32>
    %cst_40 = arith.constant 0.0714285746 : f32
    %94 = vector.broadcast %cst_40 : f32 to vector<4x32xf32>
    %95 = arith.mulf %93, %94 : vector<4x32xf32>
    %96 = vector.broadcast %92 : vector<1x32xf32> to vector<4x32xf32>
    %97 = arith.addf %95, %96 : vector<4x32xf32>
    %c192 = arith.constant 192 : index
    %c0_41 = arith.constant 0 : index
    %98 = vector.load %arg2[%c192, %c0_41] : memref<456x32xf32, #tpu.memory_space<vmem>>, vector<32x16xf32>
    %c451 = arith.constant 451 : index
    %c0_42 = arith.constant 0 : index
    %99 = vector.load %arg2[%c451, %c0_42] : memref<456x32xf32, #tpu.memory_space<vmem>>, vector<1x16xf32>
    %cst_43 = arith.constant dense<0.000000e+00> : vector<4x16xf32>
    %100 = tpu.matmul %97, %98, %cst_43 {dimension_numbers = #tpu.dot_dimension_numbers<[1], [0], [0], [1], [0, 0, 1, 1], [], []>} : vector<4x32xf32>, vector<32x16xf32>, vector<4x16xf32> -> vector<4x16xf32>
    %101 = vector.broadcast %99 : vector<1x16xf32> to vector<4x16xf32>
    %102 = arith.addf %100, %101 : vector<4x16xf32>
    %cst_44 = arith.constant 0.000000e+00 : f32
    %103 = vector.broadcast %cst_44 : f32 to vector<4x16xf32>
    %104 = arith.maximumf %102, %103 : vector<4x16xf32>
    %c0_45 = arith.constant 0 : index
    %c0_46 = arith.constant 0 : index
    %105 = vector.load %arg4[%c0_45, %c0_46] : memref<4x16xf32, #tpu.memory_space<vmem>>, vector<4x16xf32>
    tpu.vector_store %arg4[%c0_45, %c0_46], %104 {strides = array<i32>} : memref<4x16xf32, #tpu.memory_space<vmem>>, vector<4x16xf32>,
    return
  }
  func.func @transform_0(%arg0: i32) -> (i32, i32) {
    %c0_i32 = arith.constant 0 : i32
    %c0_i32_0 = arith.constant 0 : i32
    %c0_i32_1 = arith.constant 0 : i32
    return %c0_i32, %c0_i32_0 : i32, i32
  }
  func.func @transform_1(%arg0: i32) -> (i32, i32) {
    %c0_i32 = arith.constant 0 : i32
    %c0_i32_0 = arith.constant 0 : i32
    %c0_i32_1 = arith.constant 0 : i32
    return %c0_i32, %c0_i32_0 : i32, i32
  }
  func.func @transform_2(%arg0: i32) -> (i32, i32, i32) {
    %c0_i32 = arith.constant 0 : i32
    %c0_i32_0 = arith.constant 0 : i32
    %c0_i32_1 = arith.constant 0 : i32
    %c0_i32_2 = arith.constant 0 : i32
    return %c0_i32, %c0_i32_0, %c0_i32_1 : i32, i32, i32
  }
  func.func @transform_3(%arg0: i32) -> (i32, i32) {
    %c0_i32 = arith.constant 0 : i32
    %c0_i32_0 = arith.constant 0 : i32
    %c0_i32_1 = arith.constant 0 : i32
    return %c0_i32, %c0_i32_0 : i32, i32
  }
}

</mosaic_0001>

<llo_original>
// kernel: daml_doc_features.1
$region0: #{daml_doc_features.1}
  #allocation0 [shape = 'u32[]', space=smem, size = 0x4, offset = 0x4, fixed_abs, tag = 'smem constant byte address 0x4 - core index']
  #allocation1 [shape = 'u32[144,128]{1,0:T(1,128)}', space=vmem, size = 0x12000, scoped, tag = 'internal scratch']
  %s0 = inlined_call_operand.vmem [shape: f32[96,224], index: 0, kind: input, shape index: {}]
  %s1 = inlined_call_operand.vmem [shape: f32[456,32], index: 1, kind: input, shape index: {}]
  %s2 = inlined_call_operand.vmem [shape: f32[3,4,96], index: 2, kind: input, shape index: {}]
  %s3 = inlined_call_operand.vmem [shape: f32[4,16], index: 3, kind: output, shape index: {}]
  %s4 = sld [smem:[#allocation0]]
  $region22: #{daml_doc_features.1} parent=0
    _
  %s6 = ssub.s32 1, %s4
  %s7 = scalar_select 0, %s6, %s4
  // Predicated region
  $region2: #{daml_doc_features.1} parent=0 // pred_check
    _
  $region3: #{daml_doc_features.1} parent=0 // pred_check_branch
    %9 = sbr.rel (0) target = $region5
  $region4: #{daml_doc_features.1} parent=0 // pred_region
    _
  $region5: #{daml_doc_features.1} parent=0 // pred_fallthru
    _
  // Predicated region
  $region6: #{daml_doc_features.1} parent=0 // pred_check
    _
  $region7: #{daml_doc_features.1} parent=0 // pred_check_branch
    %11 = sbr.rel (0) target = $region9
  $region8: #{daml_doc_features.1} parent=0 // pred_region
    _
  $region9: #{daml_doc_features.1} parent=0 // pred_fallthru
    _
  // Predicated region
  $region10: #{daml_doc_features.1} parent=0 // pred_check
    _
  $region11: #{daml_doc_features.1} parent=0 // pred_check_branch
    %13 = sbr.rel (0) target = $region13
  $region12: #{daml_doc_features.1} parent=0 // pred_region
    _
  $region13: #{daml_doc_features.1} parent=0 // pred_fallthru
    _
  %v14 = vld [vmem:[%s0] sm:$0xff]
  %v15 = vld [vmem:[%s0 + $0x8] sm:$0xff]
  %v16 = vld [vmem:[%s0 + $0x10] sm:$0xff]
  %v17 = vld [vmem:[%s0 + $0x18] sm:$0xff]
  %v18 = vld [vmem:[%s0 + $0x20] sm:$0xff]
  %v19 = vld [vmem:[%s0 + $0x28] sm:$0xff]
  %v20 = vld [vmem:[%s0 + $0x30] sm:$0xff]
  %v21 = vld [vmem:[%s0 + $0x38] sm:$0xff]
  %v22 = vld [vmem:[%s0 + $0x40] sm:$0xff]
  %v23 = vld [vmem:[%s0 + $0x48] sm:$0xff]
  %v24 = vld [vmem:[%s0 + $0x50] sm:$0xff]
  %v25 = vld [vmem:[%s0 + $0x58] sm:$0xff]
  %v26 = vld [vmem:[%s0 + $0x60] sm:$0xff]
  %v27 = vld [vmem:[%s0 + $0x68] sm:$0xff]
  %v28 = vld [vmem:[%s0 + $0x70] sm:$0xff]
  %v29 = vld [vmem:[%s0 + $0x78] sm:$0xff]
  %v30 = vld [vmem:[%s0 + $0x80] sm:$0xff]
  %v31 = vld [vmem:[%s0 + $0x88] sm:$0xff]
  %v32 = vld [vmem:[%s0 + $0x90] sm:$0xff]
  %v33 = vld [vmem:[%s0 + $0x98] sm:$0xff]
  %v34 = vld [vmem:[%s0 + $0xa0] sm:$0xff]
  %v35 = vld [vmem:[%s0 + $0xa8] sm:$0xff]
  %v36 = vld [vmem:[%s0 + $0xb0] sm:$0xff]
  %v37 = vld [vmem:[%s0 + $0xb8] sm:$0xff]
  %v38 = vld [vmem:[%s1 + $0xe0] sm:$0xff]
  %v39 = vld [vmem:[%s1 + $0xe8] sm:$0xff]
  %v40 = vld [vmem:[%s1 + $0xf0] sm:$0xff]
  %v41 = vld [vmem:[%s1 + $0xf8] sm:$0xff]
  %v42 = vld [vmem:[%s1 + $0x100] sm:$0xff]
  %v43 = vld [vmem:[%s1 + $0x108] sm:$0xff]
  %v44 = vld [vmem:[%s1 + $0x110] sm:$0xff]
  %v45 = vld [vmem:[%s1 + $0x118] sm:$0xff]
  %v46 = vld [vmem:[%s1 + $0x120] sm:$0xff]
  %v47 = vld [vmem:[%s1 + $0x128] sm:$0xff]
  %v48 = vld [vmem:[%s1 + $0x130] sm:$0xff]
  %v49 = vld [vmem:[%s1 + $0x138] sm:$0xff]
  %v50 = vld [vmem:[%s1 + $0x140] sm:$0xff]
  %v51 = vld [vmem:[%s1 + $0x148] sm:$0xff]
  %v52 = vld [vmem:[%s1 + $0x150] sm:$0xff]
  %v53 = vld [vmem:[%s1 + $0x158] sm:$0xff]
  %v54 = vld [vmem:[%s1 + $0x160] sm:$0xff]
  %v55 = vld [vmem:[%s1 + $0x168] sm:$0xff]
  %v56 = vld [vmem:[%s1 + $0x170] sm:$0xff]
  %v57 = vld [vmem:[%s1 + $0x178] sm:$0xff]
  %v58 = vld [vmem:[%s1 + $0x180] sm:$0xff]
  %v59 = vld [vmem:[%s1 + $0x188] sm:$0xff]
  %v60 = vld [vmem:[%s1 + $0x190] sm:$0xff]
  %v61 = vld [vmem:[%s1 + $0x198] sm:$0xff]
  %v62 = vld [vmem:[%s1 + $0x1a0] sm:$0xff]
  %v63 = vld [vmem:[%s1 + $0x1a8] sm:$0xff]
  %v64 = vld [vmem:[%s1 + $0x1b0] sm:$0xff]
  %v65 = vld [vmem:[%s1 + $0x1b8] sm:$0xff]
  %v66 = vld [vmem:[%s1 + $0x1c0] sm:$0x1]
  %s68 = vtos %v66
  %v69 = vstv %s68
  %vm71 = vcmask 785408
  %v73 = vsel %vm71, %v15, 0
  %v76 = vsel %vm71, %v17, 0
  %v79 = vsel %vm71, %v19, 0
  %v82 = vsel %vm71, %v21, 0
  %v85 = vsel %vm71, %v23, 0
  %v88 = vsel %vm71, %v25, 0
  %v91 = vsel %vm71, %v27, 0
  %v94 = vsel %vm71, %v29, 0
  %v97 = vsel %vm71, %v31, 0
  %v100 = vsel %vm71, %v33, 0
  %v103 = vsel %vm71, %v35, 0
  %v106 = vsel %vm71, %v37, 0
  %108 = vmatprep.subr.mxu0 0.0
  %109 = vmatpush1.msra.mxu0 %v38
  %110 = vmatprep.subr.mxu0 0.0
  %111 = vmatpush1.msra.mxu0 %v39
  %112 = vmatprep.subr.mxu0 0.0
  %113 = vmatpush1.msra.mxu0 %v40
  %114 = vmatprep.subr.mxu0 0.0
  %115 = vmatpush1.msra.mxu0 %v41
  %116 = vmatprep.subr.mxu0 0.0
  %117 = vmatpush1.msra.mxu0 %v42
  %118 = vmatprep.subr.mxu0 0.0
  %119 = vmatpush1.msra.mxu0 %v43
  %120 = vmatprep.subr.mxu0 0.0
  %121 = vmatpush1.msra.mxu0 %v44
  %122 = vmatprep.subr.mxu0 0.0
  %123 = vmatpush1.msra.mxu0 %v45
  %124 = vmatprep.subr.mxu0 0.0
  %125 = vmatpush1.msra.mxu0 %v46
  %126 = vmatprep.subr.mxu0 0.0
  %127 = vmatpush1.msra.mxu0 %v47
  %128 = vmatprep.subr.mxu0 0.0
  %129 = vmatpush1.msra.mxu0 %v48
  %130 = vmatprep.subr.mxu0 0.0
  %131 = vmatpush1.msra.mxu0 %v49
  %132 = vmatprep.subr.mxu0 0.0
  %133 = vmatpush1.msra.mxu0 %v50
  %134 = vmatprep.subr.mxu0 0.0
  %135 = vmatpush1.msra.mxu0 %v51
  %136 = vmatprep.subr.mxu0 0.0
  %137 = vmatpush1.msra.mxu0 %v52
  %138 = vmatprep.subr.mxu0 0.0
  %139 = vmatpush1.msra.mxu0 %v53
  %140 = vmatprep.subr.mxu0 0.0
  %141 = vmatpush1.msra.mxu0 %v54
  %142 = vmatprep.subr.mxu0 0.0
  %143 = vmatpush1.msra.mxu0 %v55
  %144 = vmatprep.subr.mxu0 0.0
  %145 = vmatpush1.msra.mxu0 %v56
  %146 = vmatprep.subr.mxu0 0.0
  %147 = vmatpush1.msra.mxu0 %v57
  %148 = vmatprep.subr.mxu0 0.0
  %149 = vmatpush1.msra.mxu0 %v58
  %150 = vmatprep.subr.mxu0 0.0
  %151 = vmatpush1.msra.mxu0 %v59
  %152 = vmatprep.subr.mxu0 0.0
  %153 = vmatpush1.msra.mxu0 %v60
  %154 = vmatprep.subr.mxu0 0.0
  %155 = vmatpush1.msra.mxu0 %v61
  %156 = vmatprep.subr.mxu0 0.0
  %157 = vmatpush1.msra.mxu0 %v62
  %158 = vmatprep.subr.mxu0 0.0
  %159 = vmatpush1.msra.mxu0 %v63
  %160 = vmatprep.subr.mxu0 0.0
  %161 = vmatpush1.msra.mxu0 %v64
  %162 = vmatprep.subr.mxu0 0.0
  %163 = vmatpush1.msra.mxu0 %v65
  %164 = vmatprep.subr.mxu0 0.0
  %165 = vmatpush1.msra.mxu0 0.0
  %166 = vmatprep.subr.mxu0 0.0
  %167 = vmatpush1.msra.mxu0 0.0
  %168 = vmatprep.subr.mxu0 0.0
  %169 = vmatpush1.msra.mxu0 0.0
  %170 = vmatprep.subr.mxu0 0.0
  %171 = vmatpush1.msra.mxu0 0.0
  %172 = vmatprep.mubr.f32.mxu0 %v73
  %173 = vmatmul.mubr.f32.gmra.mrb[0].mxu0 %v14
  %v174 = vpop.f32.mrb[0].mxu0
  %v175 = vadd.f32 %v69, %v174
  %v176 = vpop.f32.mrb[0].mxu0
  %177 = vmatprep.mubr.f32.mxu0 %v76
  %178 = vmatmul.mubr.f32.gmra.mrb[0].mxu0 %v16
  %v179 = vpop.f32.mrb[0].mxu0
  %v180 = vadd.f32 %v69, %v179
  %v181 = vpop.f32.mrb[0].mxu0
  %182 = vmatprep.mubr.f32.mxu0 %v79
  %183 = vmatmul.mubr.f32.gmra.mrb[0].mxu0 %v18
  %v184 = vpop.f32.mrb[0].mxu0
  %v185 = vadd.f32 %v69, %v184
  %v186 = vpop.f32.mrb[0].mxu0
  %187 = vmatprep.mubr.f32.mxu0 %v82
  %188 = vmatmul.mubr.f32.gmra.mrb[0].mxu0 %v20
  %v189 = vpop.f32.mrb[0].mxu0
  %v190 = vadd.f32 %v69, %v189
  %v191 = vpop.f32.mrb[0].mxu0
  %192 = vmatprep.mubr.f32.mxu0 %v85
  %193 = vmatmul.mubr.f32.gmra.mrb[0].mxu0 %v22
  %v194 = vpop.f32.mrb[0].mxu0
  %v195 = vadd.f32 %v69, %v194
  %v196 = vpop.f32.mrb[0].mxu0
  %197 = vmatprep.mubr.f32.mxu0 %v88
  %198 = vmatmul.mubr.f32.gmra.mrb[0].mxu0 %v24
  %v199 = vpop.f32.mrb[0].mxu0
  %v200 = vadd.f32 %v69, %v199
  %v201 = vpop.f32.mrb[0].mxu0
  %202 = vmatprep.mubr.f32.mxu0 %v91
  %203 = vmatmul.mubr.f32.gmra.mrb[0].mxu0 %v26
  %v204 = vpop.f32.mrb[0].mxu0
  %v205 = vadd.f32 %v69, %v204
  %v206 = vpop.f32.mrb[0].mxu0
  %207 = vmatprep.mubr.f32.mxu0 %v94
  %208 = vmatmul.mubr.f32.gmra.mrb[0].mxu0 %v28
  %v209 = vpop.f32.mrb[0].mxu0
  %v210 = vadd.f32 %v69, %v209
  %v211 = vpop.f32.mrb[0].mxu0
  %212 = vmatprep.mubr.f32.mxu0 %v97
  %213 = vmatmul.mubr.f32.gmra.mrb[0].mxu0 %v30
  %v214 = vpop.f32.mrb[0].mxu0
  %v215 = vadd.f32 %v69, %v214
  %v216 = vpop.f32.mrb[0].mxu0
  %217 = vmatprep.mubr.f32.mxu0 %v100
  %218 = vmatmul.mubr.f32.gmra.mrb[0].mxu0 %v32
  %v219 = vpop.f32.mrb[0].mxu0
  %v220 = vadd.f32 %v69, %v219
  %v221 = vpop.f32.mrb[0].mxu0
  %222 = vmatprep.mubr.f32.mxu0 %v103
  %223 = vmatmul.mubr.f32.gmra.mrb[0].mxu0 %v34
  %v224 = vpop.f32.mrb[0].mxu0
  %v225 = vadd.f32 %v69, %v224
  %v226 = vpop.f32.mrb[0].mxu0
  %227 = vmatprep.mubr.f32.mxu0 %v106
  %228 = vmatmul.mubr.f32.gmra.mrb[0].mxu0 %v36
  %v229 = vpop.f32.mrb[0].mxu0
  %v230 = vadd.f32 %v69, %v229
  %v231 = vpop.f32.mrb[0].mxu0
  %232 = vdwg.mxu0
  %v233 = vxor.u32 %v175, 2147483648
  %v234 = vxor.u32 %v180, 2147483648
  %v235 = vxor.u32 %v185, 2147483648
  %v236 = vxor.u32 %v190, 2147483648
  %v237 = vxor.u32 %v195, 2147483648
  %v238 = vxor.u32 %v200, 2147483648
  %v239 = vxor.u32 %v205, 2147483648
  %v240 = vxor.u32 %v210, 2147483648
  %v241 = vxor.u32 %v215, 2147483648
  %v242 = vxor.u32 %v220, 2147483648
  %v243 = vxor.u32 %v225, 2147483648
  %v244 = vxor.u32 %v230, 2147483648
  %v245 = vmul.f32 %v233, 1.442695
  %v246 = vpow.pop %v245
  %v247 = vmul.f32 %v234, 1.442695
  %v248 = vpow.pop %v247
  %v249 = vmul.f32 %v235, 1.442695
  %v250 = vpow.pop %v249
  %v251 = vmul.f32 %v236, 1.442695
  %v252 = vpow.pop %v251
  %v253 = vmul.f32 %v237, 1.442695
  %v254 = vpow.pop %v253
  %v255 = vmul.f32 %v238, 1.442695
  %v256 = vpow.pop %v255
  %v257 = vmul.f32 %v239, 1.442695
  %v258 = vpow.pop %v257
  %v259 = vmul.f32 %v240, 1.442695
  %v260 = vpow.pop %v259
  %v261 = vmul.f32 %v241, 1.442695
  %v262 = vpow.pop %v261
  %v263 = vmul.f32 %v242, 1.442695
  %v264 = vpow.pop %v263
  %v265 = vmul.f32 %v243, 1.442695
  %v266 = vpow.pop %v265
  %v267 = vmul.f32 %v244, 1.442695
  %v268 = vpow.pop %v267
  %v269 = vadd.f32 %v246, 1.0
  %v270 = vadd.f32 %v248, 1.0
  %v271 = vadd.f32 %v250, 1.0
  %v272 = vadd.f32 %v252, 1.0
  %v273 = vadd.f32 %v254, 1.0
  %v274 = vadd.f32 %v256, 1.0
  %v275 = vadd.f32 %v258, 1.0
  %v276 = vadd.f32 %v260, 1.0
  %v277 = vadd.f32 %v262, 1.0
  %v278 = vadd.f32 %v264, 1.0
  %v279 = vadd.f32 %v266, 1.0
  %v280 = vadd.f32 %v268, 1.0
  %v281 = vrcp.pop %v269
  %v282 = vmul.f32 1.0, %v281
  %v283 = vrcp.pop %v270
  %v284 = vmul.f32 1.0, %v283
  %v285 = vrcp.pop %v271
  %v286 = vmul.f32 1.0, %v285
  %v287 = vrcp.pop %v272
  %v288 = vmul.f32 1.0, %v287
  %v289 = vrcp.pop %v273
  %v290 = vmul.f32 1.0, %v289
  %v291 = vrcp.pop %v274
  %v292 = vmul.f32 1.0, %v291
  %v293 = vrcp.pop %v275
  %v294 = vmul.f32 1.0, %v293
  %v295 = vrcp.pop %v276
  %v296 = vmul.f32 1.0, %v295
  %v297 = vrcp.pop %v277
  %v298 = vmul.f32 1.0, %v297
  %v299 = vrcp.pop %v278
  %v300 = vmul.f32 1.0, %v299
  %v301 = vrcp.pop %v279
  %v302 = vmul.f32 1.0, %v301
  %v303 = vrcp.pop %v280
  %v304 = vmul.f32 1.0, %v303
  %306 = vset.pattern.permute.xlu0 0
  %307 = vperm.xlu0 %306, %v282
  %v308 = vpop.permute.xlu0 %307
  %311 = vset.pattern.permute.xlu0 0
  %312 = vperm.xlu0 %311, %v284
  %v313 = vpop.permute.xlu0 %312
  %316 = vset.pattern.permute.xlu0 0
  %317 = vperm.xlu0 %316, %v286
  %v318 = vpop.permute.xlu0 %317
  %321 = vset.pattern.permute.xlu0 0
  %322 = vperm.xlu0 %321, %v288
  %v323 = vpop.permute.xlu0 %322
  %326 = vset.pattern.permute.xlu0 0
  %327 = vperm.xlu0 %326, %v290
  %v328 = vpop.permute.xlu0 %327
  %331 = vset.pattern.permute.xlu0 0
  %332 = vperm.xlu0 %331, %v292
  %v333 = vpop.permute.xlu0 %332
  %336 = vset.pattern.permute.xlu0 0
  %337 = vperm.xlu0 %336, %v294
  %v338 = vpop.permute.xlu0 %337
  %341 = vset.pattern.permute.xlu0 0
  %342 = vperm.xlu0 %341, %v296
  %v343 = vpop.permute.xlu0 %342
  %346 = vset.pattern.permute.xlu0 0
  %347 = vperm.xlu0 %346, %v298
  %v348 = vpop.permute.xlu0 %347
  %351 = vset.pattern.permute.xlu0 0
  %352 = vperm.xlu0 %351, %v300
  %v353 = vpop.permute.xlu0 %352
  %356 = vset.pattern.permute.xlu0 0
  %357 = vperm.xlu0 %356, %v302
  %v358 = vpop.permute.xlu0 %357
  %361 = vset.pattern.permute.xlu0 0
  %362 = vperm.xlu0 %361, %v304
  %v363 = vpop.permute.xlu0 %362
  %v365 = vmul.f32 %v14, %v308
  %v366 = vmul.f32 %v16, %v313
  %v367 = vmul.f32 %v18, %v318
  %v368 = vmul.f32 %v20, %v323
  %v369 = vmul.f32 %v22, %v328
  %v370 = vmul.f32 %v24, %v333
  %v371 = vmul.f32 %v26, %v338
  %v372 = vmul.f32 %v28, %v343
  %v373 = vmul.f32 %v30, %v348
  %v374 = vmul.f32 %v32, %v353
  %v375 = vmul.f32 %v34, %v358
  %v376 = vmul.f32 %v36, %v363
  %377 = vset.pattern.permute.xlu0 1
  %378 = vperm.xlu0 %377, %v282
  %v379 = vpop.permute.xlu0 %378
  %381 = vset.pattern.permute.xlu0 1
  %382 = vperm.xlu0 %381, %v284
  %v383 = vpop.permute.xlu0 %382
  %385 = vset.pattern.permute.xlu0 1
  %386 = vperm.xlu0 %385, %v286
  %v387 = vpop.permute.xlu0 %386
  %389 = vset.pattern.permute.xlu0 1
  %390 = vperm.xlu0 %389, %v288
  %v391 = vpop.permute.xlu0 %390
  %393 = vset.pattern.permute.xlu0 1
  %394 = vperm.xlu0 %393, %v290
  %v395 = vpop.permute.xlu0 %394
  %397 = vset.pattern.permute.xlu0 1
  %398 = vperm.xlu0 %397, %v292
  %v399 = vpop.permute.xlu0 %398
  %401 = vset.pattern.permute.xlu0 1
  %402 = vperm.xlu0 %401, %v294
  %v403 = vpop.permute.xlu0 %402
  %405 = vset.pattern.permute.xlu0 1
  %406 = vperm.xlu0 %405, %v296
  %v407 = vpop.permute.xlu0 %406
  %409 = vset.pattern.permute.xlu0 1
  %410 = vperm.xlu0 %409, %v298
  %v411 = vpop.permute.xlu0 %410
  %413 = vset.pattern.permute.xlu0 1
  %414 = vperm.xlu0 %413, %v300
  %v415 = vpop.permute.xlu0 %414
  %417 = vset.pattern.permute.xlu0 1
  %418 = vperm.xlu0 %417, %v302
  %v419 = vpop.permute.xlu0 %418
  %421 = vset.pattern.permute.xlu0 1
  %422 = vperm.xlu0 %421, %v304
  %v423 = vpop.permute.xlu0 %422
  %v425 = vmul.f32 %v14, %v379
  %v426 = vmul.f32 %v16, %v383
  %v427 = vmul.f32 %v18, %v387
  %v428 = vmul.f32 %v20, %v391
  %v429 = vmul.f32 %v22, %v395
  %v430 = vmul.f32 %v24, %v399
  %v431 = vmul.f32 %v26, %v403
  %v432 = vmul.f32 %v28, %v407
  %v433 = vmul.f32 %v30, %v411
  %v434 = vmul.f32 %v32, %v415
  %v435 = vmul.f32 %v34, %v419
  %v436 = vmul.f32 %v36, %v423
  %437 = vset.pattern.permute.xlu0 2
  %438 = vperm.xlu0 %437, %v282
  %v439 = vpop.permute.xlu0 %438
  %441 = vset.pattern.permute.xlu0 2
  %442 = vperm.xlu0 %441, %v284
  %v443 = vpop.permute.xlu0 %442
  %445 = vset.pattern.permute.xlu0 2
  %446 = vperm.xlu0 %445, %v286
  %v447 = vpop.permute.xlu0 %446
  %449 = vset.pattern.permute.xlu0 2
  %450 = vperm.xlu0 %449, %v288
  %v451 = vpop.permute.xlu0 %450
  %453 = vset.pattern.permute.xlu0 2
  %454 = vperm.xlu0 %453, %v290
  %v455 = vpop.permute.xlu0 %454
  %457 = vset.pattern.permute.xlu0 2
  %458 = vperm.xlu0 %457, %v292
  %v459 = vpop.permute.xlu0 %458
  %461 = vset.pattern.permute.xlu0 2
  %462 = vperm.xlu0 %461, %v294
  %v463 = vpop.permute.xlu0 %462
  %465 = vset.pattern.permute.xlu0 2
  %466 = vperm.xlu0 %465, %v296
  %v467 = vpop.permute.xlu0 %466
  %469 = vset.pattern.permute.xlu0 2
  %470 = vperm.xlu0 %469, %v298
  %v471 = vpop.permute.xlu0 %470
  %473 = vset.pattern.permute.xlu0 2
  %474 = vperm.xlu0 %473, %v300
  %v475 = vpop.permute.xlu0 %474
  %477 = vset.pattern.permute.xlu0 2
  %478 = vperm.xlu0 %477, %v302
  %v479 = vpop.permute.xlu0 %478
  %481 = vset.pattern.permute.xlu0 2
  %482 = vperm.xlu0 %481, %v304
  %v483 = vpop.permute.xlu0 %482
  %v485 = vmul.f32 %v15, %v439
  %v486 = vmul.f32 %v17, %v443
  %v487 = vmul.f32 %v19, %v447
  %v488 = vmul.f32 %v21, %v451
  %v489 = vmul.f32 %v23, %v455
  %v490 = vmul.f32 %v25, %v459
  %v491 = vmul.f32 %v27, %v463
  %v492 = vmul.f32 %v29, %v467
  %v493 = vmul.f32 %v31, %v471
  %v494 = vmul.f32 %v33, %v475
  %v495 = vmul.f32 %v35, %v479
  %v496 = vmul.f32 %v37, %v483
  %509 = vrot.lane.b32.xlu0 %v365, 64
  %v510 = vpop.permute.xlu0 %509
  %511 = vrot.lane.b32.xlu0 %v366, 64
  %v512 = vpop.permute.xlu0 %511
  %513 = vrot.lane.b32.xlu0 %v367, 64
  %v514 = vpop.permute.xlu0 %513
  %515 = vrot.lane.b32.xlu0 %v368, 64
  %v516 = vpop.permute.xlu0 %515
  %517 = vrot.lane.b32.xlu0 %v369, 64
  %v518 = vpop.permute.xlu0 %517
  %519 = vrot.lane.b32.xlu0 %v370, 64
  %v520 = vpop.permute.xlu0 %519
  %521 = vrot.lane.b32.xlu0 %v371, 64
  %v522 = vpop.permute.xlu0 %521
  %523 = vrot.lane.b32.xlu0 %v372, 64
  %v524 = vpop.permute.xlu0 %523
  %525 = vrot.lane.b32.xlu0 %v373, 64
  %v526 = vpop.permute.xlu0 %525
  %527 = vrot.lane.b32.xlu0 %v374, 64
  %v528 = vpop.permute.xlu0 %527
  %529 = vrot.lane.b32.xlu0 %v375, 64
  %v530 = vpop.permute.xlu0 %529
  %531 = vrot.lane.b32.xlu0 %v376, 64
  %v532 = vpop.permute.xlu0 %531
  %557 = vrot.lane.b32.xlu0 %v425, 64
  %v558 = vpop.permute.xlu0 %557
  %559 = vrot.lane.b32.xlu0 %v426, 64
  %v560 = vpop.permute.xlu0 %559
  %561 = vrot.lane.b32.xlu0 %v427, 64
  %v562 = vpop.permute.xlu0 %561
  %563 = vrot.lane.b32.xlu0 %v428, 64
  %v564 = vpop.permute.xlu0 %563
  %565 = vrot.lane.b32.xlu0 %v429, 64
  %v566 = vpop.permute.xlu0 %565
  %567 = vrot.lane.b32.xlu0 %v430, 64
  %v568 = vpop.permute.xlu0 %567
  %569 = vrot.lane.b32.xlu0 %v431, 64
  %v570 = vpop.permute.xlu0 %569
  %571 = vrot.lane.b32.xlu0 %v432, 64
  %v572 = vpop.permute.xlu0 %571
  %573 = vrot.lane.b32.xlu0 %v433, 64
  %v574 = vpop.permute.xlu0 %573
  %575 = vrot.lane.b32.xlu0 %v434, 64
  %v576 = vpop.permute.xlu0 %575
  %577 = vrot.lane.b32.xlu0 %v435, 64
  %v578 = vpop.permute.xlu0 %577
  %579 = vrot.lane.b32.xlu0 %v436, 64
  %v580 = vpop.permute.xlu0 %579
  %605 = vrot.lane.b32.xlu0 %v485, 64
  %v606 = vpop.permute.xlu0 %605
  %607 = vrot.lane.b32.xlu0 %v486, 64
  %v608 = vpop.permute.xlu0 %607
  %609 = vrot.lane.b32.xlu0 %v487, 64
  %v610 = vpop.permute.xlu0 %609
  %611 = vrot.lane.b32.xlu0 %v488, 64
  %v612 = vpop.permute.xlu0 %611
  %613 = vrot.lane.b32.xlu0 %v489, 64
  %v614 = vpop.permute.xlu0 %613
  %615 = vrot.lane.b32.xlu0 %v490, 64
  %v616 = vpop.permute.xlu0 %615
  %617 = vrot.lane.b32.xlu0 %v491, 64
  %v618 = vpop.permute.xlu0 %617
  %619 = vrot.lane.b32.xlu0 %v492, 64
  %v620 = vpop.permute.xlu0 %619
  %621 = vrot.lane.b32.xlu0 %v493, 64
  %v622 = vpop.permute.xlu0 %621
  %623 = vrot.lane.b32.xlu0 %v494, 64
  %v624 = vpop.permute.xlu0 %623
  %625 = vrot.lane.b32.xlu0 %v495, 64
  %v626 = vpop.permute.xlu0 %625
  %627 = vrot.lane.b32.xlu0 %v496, 64
  %v628 = vpop.permute.xlu0 %627
  %vm641 = vcmask 261120
  %v642 = vsel %vm641, %v510, %v558
  %v643 = vsel %vm641, %v512, %v560
  %v644 = vsel %vm641, %v514, %v562
  %v645 = vsel %vm641, %v516, %v564
  %v646 = vsel %vm641, %v518, %v566
  %v647 = vsel %vm641, %v520, %v568
  %v648 = vsel %vm641, %v522, %v570
  %v649 = vsel %vm641, %v524, %v572
  %v650 = vsel %vm641, %v526, %v574
  %v651 = vsel %vm641, %v528, %v576
  %v652 = vsel %vm641, %v530, %v578
  %v653 = vsel %vm641, %v532, %v580
  %vm654 = vcmask 523264
  %v655 = vsel %vm654, %v642, %v606
  %v656 = vsel %vm654, %v643, %v608
  %v657 = vsel %vm654, %v644, %v610
  %v658 = vsel %vm654, %v645, %v612
  %v659 = vsel %vm654, %v646, %v614
  %v660 = vsel %vm654, %v647, %v616
  %v661 = vsel %vm654, %v648, %v618
  %v662 = vsel %vm654, %v649, %v620
  %v663 = vsel %vm654, %v650, %v622
  %v664 = vsel %vm654, %v651, %v624
  %v665 = vsel %vm654, %v652, %v626
  %v666 = vsel %vm654, %v653, %v628
  %v667 = vld [vmem:[%s1] sm:$0xff]
  %v668 = vld [vmem:[%s1 + $0x8] sm:$0xff]
  %v669 = vld [vmem:[%s1 + $0x10] sm:$0xff]
  %v670 = vld [vmem:[%s1 + $0x18] sm:$0xff]
  %v671 = vld [vmem:[%s1 + $0x20] sm:$0xff]
  %v672 = vld [vmem:[%s1 + $0x28] sm:$0xff]
  %v673 = vld [vmem:[%s1 + $0x30] sm:$0xff]
  %v674 = vld [vmem:[%s1 + $0x38] sm:$0xff]
  %v675 = vld [vmem:[%s1 + $0x40] sm:$0xff]
  %v676 = vld [vmem:[%s1 + $0x48] sm:$0xff]
  %v677 = vld [vmem:[%s1 + $0x50] sm:$0xff]
  %v678 = vld [vmem:[%s1 + $0x58] sm:$0xff]
  %v679 = vld [vmem:[%s1 + $0x1c1] sm:$0x1]
  %v680 = vlaneseq
  %v681 = vshrl.u32 %v680, 7
  %v682 = vsub.s32 0, %v681
  %v683 = vrot.slane %v679, %v682
  %v685 = vsel %vm71, %v655, 0
  %v688 = vsel %vm71, %v656, 0
  %v691 = vsel %vm71, %v657, 0
  %v694 = vsel %vm71, %v658, 0
  %v697 = vsel %vm71, %v659, 0
  %v700 = vsel %vm71, %v660, 0
  %v703 = vsel %vm71, %v661, 0
  %v706 = vsel %vm71, %v662, 0
  %v709 = vsel %vm71, %v663, 0
  %v712 = vsel %vm71, %v664, 0
  %v715 = vsel %vm71, %v665, 0
  %v718 = vsel %vm71, %v666, 0
  %720 = vmatprep.subr.mxu0 0.0
  %721 = vmatpush1.msra.mxu0 %v667
  %722 = vmatprep.subr.mxu0 0.0
  %723 = vmatpush1.msra.mxu0 %v668
  %724 = vmatprep.subr.mxu0 0.0
  %725 = vmatpush1.msra.mxu0 %v669
  %726 = vmatprep.subr.mxu0 0.0
  %727 = vmatpush1.msra.mxu0 %v670
  %728 = vmatprep.subr.mxu0 0.0
  %729 = vmatpush1.msra.mxu0 %v671
  %730 = vmatprep.subr.mxu0 0.0
  %731 = vmatpush1.msra.mxu0 %v672
  %732 = vmatprep.subr.mxu0 0.0
  %733 = vmatpush1.msra.mxu0 %v673
  %734 = vmatprep.subr.mxu0 0.0
  %735 = vmatpush1.msra.mxu0 %v674
  %736 = vmatprep.subr.mxu0 0.0
  %737 = vmatpush1.msra.mxu0 %v675
  %738 = vmatprep.subr.mxu0 0.0
  %739 = vmatpush1.msra.mxu0 %v676
  %740 = vmatprep.subr.mxu0 0.0
  %741 = vmatpush1.msra.mxu0 %v677
  %742 = vmatprep.subr.mxu0 0.0
  %743 = vmatpush1.msra.mxu0 %v678
  %744 = vmatprep.subr.mxu0 0.0
  %745 = vmatpush1.msra.mxu0 0.0
  %746 = vmatprep.subr.mxu0 0.0
  %747 = vmatpush1.msra.mxu0 0.0
  %748 = vmatprep.subr.mxu0 0.0
  %749 = vmatpush1.msra.mxu0 0.0
  %750 = vmatprep.subr.mxu0 0.0
  %751 = vmatpush1.msra.mxu0 0.0
  %752 = vmatprep.subr.mxu0 0.0
  %753 = vmatpush1.msra.mxu0 0.0
  %754 = vmatprep.subr.mxu0 0.0
  %755 = vmatpush1.msra.mxu0 0.0
  %756 = vmatprep.subr.mxu0 0.0
  %757 = vmatpush1.msra.mxu0 0.0
  %758 = vmatprep.subr.mxu0 0.0
  %759 = vmatpush1.msra.mxu0 0.0
  %760 = vmatprep.subr.mxu0 0.0
  %761 = vmatpush1.msra.mxu0 0.0
  %762 = vmatprep.subr.mxu0 0.0
  %763 = vmatpush1.msra.mxu0 0.0
  %764 = vmatprep.subr.mxu0 0.0
  %765 = vmatpush1.msra.mxu0 0.0
  %766 = vmatprep.subr.mxu0 0.0
  %767 = vmatpush1.msra.mxu0 0.0
  %768 = vmatprep.subr.mxu0 0.0
  %769 = vmatpush1.msra.mxu0 0.0
  %770 = vmatprep.subr.mxu0 0.0
  %771 = vmatpush1.msra.mxu0 0.0
  %772 = vmatprep.subr.mxu0 0.0
  %773 = vmatpush1.msra.mxu0 0.0
  %774 = vmatprep.subr.mxu0 0.0
  %775 = vmatpush1.msra.mxu0 0.0
  %776 = vmatprep.subr.mxu0 0.0
  %777 = vmatpush1.msra.mxu0 0.0
  %778 = vmatprep.subr.mxu0 0.0
  %779 = vmatpush1.msra.mxu0 0.0
  %780 = vmatprep.subr.mxu0 0.0
  %781 = vmatpush1.msra.mxu0 0.0
  %782 = vmatprep.subr.mxu0 0.0
  %783 = vmatpush1.msra.mxu0 0.0
  %784 = vmatprep.mubr.f32.mxu0 0.0
  %785 = vmatmul.mubr.f32.gmra.mrb[0].mxu0 %v685
  %v786 = vpop.f32.mrb[0].mxu0
  %v787 = vadd.f32 %v683, %v786
  %v788 = vpop.f32.mrb[0].mxu0
  %789 = vmatprep.mubr.f32.mxu0 0.0
  %790 = vmatmul.mubr.f32.gmra.mrb[0].mxu0 %v688
  %v791 = vpop.f32.mrb[0].mxu0
  %v792 = vadd.f32 %v683, %v791
  %v793 = vpop.f32.mrb[0].mxu0
  %794 = vmatprep.mubr.f32.mxu0 0.0
  %795 = vmatmul.mubr.f32.gmra.mrb[0].mxu0 %v691
  %v796 = vpop.f32.mrb[0].mxu0
  %v797 = vadd.f32 %v683, %v796
  %v798 = vpop.f32.mrb[0].mxu0
  %799 = vmatprep.mubr.f32.mxu0 0.0
  %800 = vmatmul.mubr.f32.gmra.mrb[0].mxu0 %v694
  %v801 = vpop.f32.mrb[0].mxu0
  %v802 = vadd.f32 %v683, %v801
  %v803 = vpop.f32.mrb[0].mxu0
  %804 = vmatprep.mubr.f32.mxu0 0.0
  %805 = vmatmul.mubr.f32.gmra.mrb[0].mxu0 %v697
  %v806 = vpop.f32.mrb[0].mxu0
  %v807 = vadd.f32 %v683, %v806
  %v808 = vpop.f32.mrb[0].mxu0
  %809 = vmatprep.mubr.f32.mxu0 0.0
  %810 = vmatmul.mubr.f32.gmra.mrb[0].mxu0 %v700
  %v811 = vpop.f32.mrb[0].mxu0
  %v812 = vadd.f32 %v683, %v811
  %v813 = vpop.f32.mrb[0].mxu0
  %814 = vmatprep.mubr.f32.mxu0 0.0
  %815 = vmatmul.mubr.f32.gmra.mrb[0].mxu0 %v703
  %v816 = vpop.f32.mrb[0].mxu0
  %v817 = vadd.f32 %v683, %v816
  %v818 = vpop.f32.mrb[0].mxu0
  %819 = vmatprep.mubr.f32.mxu0 0.0
  %820 = vmatmul.mubr.f32.gmra.mrb[0].mxu0 %v706
  %v821 = vpop.f32.mrb[0].mxu0
  %v822 = vadd.f32 %v683, %v821
  %v823 = vpop.f32.mrb[0].mxu0
  %824 = vmatprep.mubr.f32.mxu0 0.0
  %825 = vmatmul.mubr.f32.gmra.mrb[0].mxu0 %v709
  %v826 = vpop.f32.mrb[0].mxu0
  %v827 = vadd.f32 %v683, %v826
  %v828 = vpop.f32.mrb[0].mxu0
  %829 = vmatprep.mubr.f32.mxu0 0.0
  %830 = vmatmul.mubr.f32.gmra.mrb[0].mxu0 %v712
  %v831 = vpop.f32.mrb[0].mxu0
  %v832 = vadd.f32 %v683, %v831
  %v833 = vpop.f32.mrb[0].mxu0
  %834 = vmatprep.mubr.f32.mxu0 0.0
  %835 = vmatmul.mubr.f32.gmra.mrb[0].mxu0 %v715
  %v836 = vpop.f32.mrb[0].mxu0
  %v837 = vadd.f32 %v683, %v836
  %v838 = vpop.f32.mrb[0].mxu0
  %839 = vmatprep.mubr.f32.mxu0 0.0
  %840 = vmatmul.mubr.f32.gmra.mrb[0].mxu0 %v718
  %v841 = vpop.f32.mrb[0].mxu0
  %v842 = vadd.f32 %v683, %v841
  %v843 = vpop.f32.mrb[0].mxu0
  %844 = vdwg.mxu0
  %847 = vrot.lane.b32.xlu0 %v817, 112
  %v848 = vpop.permute.xlu0 %847
  %849 = vrot.lane.b32.xlu0 %v822, 112
  %v850 = vpop.permute.xlu0 %849
  %vm851 = vcmask 130048
  %v853 = vsel %vm851, %v787, 0
  %v856 = vsel %vm851, %v792, 0
  %v858 = vsel %vm851, %v848, 0
  %v860 = vsel %vm851, %v850, 0
  %862 = vmatprep.subr.mxu0 0.0
  %863 = vmatpush1.xpose.msra.mxu0 %v858
  %864 = vmatprep.subr.mxu0 0.0
  %865 = vmatpush1.xpose.msra.mxu0 %v860
  %866 = vmatprep.subr.mxu0 0.0
  %867 = vmatpush1.xpose.msra.mxu0 0.0
  %868 = vmatprep.subr.mxu0 0.0
  %869 = vmatpush1.xpose.msra.mxu0 0.0
  %870 = vmatprep.subr.mxu0 0.0
  %871 = vmatpush1.xpose.msra.mxu0 0.0
  %872 = vmatprep.subr.mxu0 0.0
  %873 = vmatpush1.xpose.msra.mxu0 0.0
  %874 = vmatprep.subr.mxu0 0.0
  %875 = vmatpush1.xpose.msra.mxu0 0.0
  %876 = vmatprep.subr.mxu0 0.0
  %877 = vmatpush1.xpose.msra.mxu0 0.0
  %878 = vmatprep.subr.mxu0 0.0
  %879 = vmatpush1.xpose.msra.mxu0 0.0
  %880 = vmatprep.subr.mxu0 0.0
  %881 = vmatpush1.xpose.msra.mxu0 0.0
  %882 = vmatprep.subr.mxu0 0.0
  %883 = vmatpush1.xpose.msra.mxu0 0.0
  %884 = vmatprep.subr.mxu0 0.0
  %885 = vmatpush1.xpose.msra.mxu0 0.0
  %886 = vmatprep.subr.mxu0 0.0
  %887 = vmatpush1.xpose.msra.mxu0 0.0
  %888 = vmatprep.subr.mxu0 0.0
  %889 = vmatpush1.xpose.msra.mxu0 0.0
  %890 = vmatprep.subr.mxu0 0.0
  %891 = vmatpush1.xpose.msra.mxu0 0.0
  %892 = vmatprep.subr.mxu0 0.0
  %893 = vmatpush1.xpose.msra.mxu0 0.0
  %894 = vmatprep.subr.mxu0 0.0
  %895 = vmatpush1.xpose.msra.mxu0 0.0
  %896 = vmatprep.subr.mxu0 0.0
  %897 = vmatpush1.xpose.msra.mxu0 0.0
  %898 = vmatprep.subr.mxu0 0.0
  %899 = vmatpush1.xpose.msra.mxu0 0.0
  %900 = vmatprep.subr.mxu0 0.0
  %901 = vmatpush1.xpose.msra.mxu0 0.0
  %902 = vmatprep.subr.mxu0 0.0
  %903 = vmatpush1.xpose.msra.mxu0 0.0
  %904 = vmatprep.subr.mxu0 0.0
  %905 = vmatpush1.xpose.msra.mxu0 0.0
  %906 = vmatprep.subr.mxu0 0.0
  %907 = vmatpush1.xpose.msra.mxu0 0.0
  %908 = vmatprep.subr.mxu0 0.0
  %909 = vmatpush1.xpose.msra.mxu0 0.0
  %910 = vmatprep.subr.mxu0 0.0
  %911 = vmatpush1.xpose.msra.mxu0 0.0
  %912 = vmatprep.subr.mxu0 0.0
  %913 = vmatpush1.xpose.msra.mxu0 0.0
  %914 = vmatprep.subr.mxu0 0.0
  %915 = vmatpush1.xpose.msra.mxu0 0.0
  %916 = vmatprep.subr.mxu0 0.0
  %917 = vmatpush1.xpose.msra.mxu0 0.0
  %918 = vmatprep.subr.mxu0 0.0
  %919 = vmatpush1.xpose.msra.mxu0 0.0
  %920 = vmatprep.subr.mxu0 0.0
  %921 = vmatpush1.xpose.msra.mxu0 0.0
  %922 = vmatprep.subr.mxu0 0.0
  %923 = vmatpush1.xpose.msra.mxu0 0.0
  %924 = vmatprep.subr.mxu0 0.0
  %925 = vmatpush1.xpose.msra.mxu0 0.0
  %926 = vmatprep.mubr.f32.mxu0 0.0
  %927 = vmatmul.mubr.f32.gmra.mrb[0].mxu0 %v853
  %v928 = vpop.f32.mrb[0].mxu0
  %v929 = vadd.f32 0.0, %v928
  %v930 = vpop.f32.mrb[0].mxu0
  %931 = vmatprep.mubr.f32.mxu0 0.0
  %932 = vmatmul.mubr.f32.gmra.mrb[0].mxu0 %v856
  %v933 = vpop.f32.mrb[0].mxu0
  %v934 = vadd.f32 0.0, %v933
  %v935 = vpop.f32.mrb[0].mxu0
  %936 = vdwg.mxu0
  %v937 = vmul.f32 %v787, %v787
  %v938 = vmul.f32 %v792, %v792
  %v939 = vsel %vm851, %v937, 0.0
  %940 = vadd.xlane.f32.xlu0 %v939
  %v941 = vpop.xlane.xlu0 %940
  %v942 = vsel %vm851, %v938, 0.0
  %943 = vadd.xlane.f32.xlu0 %v942
  %v944 = vpop.xlane.xlu0 %943
  %v945 = vmul.f32 %v817, %v817
  %v946 = vmul.f32 %v822, %v822
  %949 = vrot.lane.b32.xlu0 %v945, 112
  %v950 = vpop.permute.xlu0 %949
  %951 = vrot.lane.b32.xlu0 %v946, 112
  %v952 = vpop.permute.xlu0 %951
  %v954 = vsel %vm851, 1.0, 0
  %v956 = vsel %vm851, %v950, 0
  %v958 = vsel %vm851, %v952, 0
  %960 = vmatprep.subr.mxu0 0.0
  %961 = vmatpush1.xpose.msra.mxu0 %v956
  %962 = vmatprep.subr.mxu0 0.0
  %963 = vmatpush1.xpose.msra.mxu0 %v958
  %964 = vmatprep.subr.mxu0 0.0
  %965 = vmatpush1.xpose.msra.mxu0 0.0
  %966 = vmatprep.subr.mxu0 0.0
  %967 = vmatpush1.xpose.msra.mxu0 0.0
  %968 = vmatprep.subr.mxu0 0.0
  %969 = vmatpush1.xpose.msra.mxu0 0.0
  %970 = vmatprep.subr.mxu0 0.0
  %971 = vmatpush1.xpose.msra.mxu0 0.0
  %972 = vmatprep.subr.mxu0 0.0
  %973 = vmatpush1.xpose.msra.mxu0 0.0
  %974 = vmatprep.subr.mxu0 0.0
  %975 = vmatpush1.xpose.msra.mxu0 0.0
  %976 = vmatprep.subr.mxu0 0.0
  %977 = vmatpush1.xpose.msra.mxu0 0.0
  %978 = vmatprep.subr.mxu0 0.0
  %979 = vmatpush1.xpose.msra.mxu0 0.0
  %980 = vmatprep.subr.mxu0 0.0
  %981 = vmatpush1.xpose.msra.mxu0 0.0
  %982 = vmatprep.subr.mxu0 0.0
  %983 = vmatpush1.xpose.msra.mxu0 0.0
  %984 = vmatprep.subr.mxu0 0.0
  %985 = vmatpush1.xpose.msra.mxu0 0.0
  %986 = vmatprep.subr.mxu0 0.0
  %987 = vmatpush1.xpose.msra.mxu0 0.0
  %988 = vmatprep.subr.mxu0 0.0
  %989 = vmatpush1.xpose.msra.mxu0 0.0
  %990 = vmatprep.subr.mxu0 0.0
  %991 = vmatpush1.xpose.msra.mxu0 0.0
  %992 = vmatprep.subr.mxu0 0.0
  %993 = vmatpush1.xpose.msra.mxu0 0.0
  %994 = vmatprep.subr.mxu0 0.0
  %995 = vmatpush1.xpose.msra.mxu0 0.0
  %996 = vmatprep.subr.mxu0 0.0
  %997 = vmatpush1.xpose.msra.mxu0 0.0
  %998 = vmatprep.subr.mxu0 0.0
  %999 = vmatpush1.xpose.msra.mxu0 0.0
  %1000 = vmatprep.subr.mxu0 0.0
  %1001 = vmatpush1.xpose.msra.mxu0 0.0
  %1002 = vmatprep.subr.mxu0 0.0
  %1003 = vmatpush1.xpose.msra.mxu0 0.0
  %1004 = vmatprep.subr.mxu0 0.0
  %1005 = vmatpush1.xpose.msra.mxu0 0.0
  %1006 = vmatprep.subr.mxu0 0.0
  %1007 = vmatpush1.xpose.msra.mxu0 0.0
  %1008 = vmatprep.subr.mxu0 0.0
  %1009 = vmatpush1.xpose.msra.mxu0 0.0
  %1010 = vmatprep.subr.mxu0 0.0
  %1011 = vmatpush1.xpose.msra.mxu0 0.0
  %1012 = vmatprep.subr.mxu0 0.0
  %1013 = vmatpush1.xpose.msra.mxu0 0.0
  %1014 = vmatprep.subr.mxu0 0.0
  %1015 = vmatpush1.xpose.msra.mxu0 0.0
  %1016 = vmatprep.subr.mxu0 0.0
  %1017 = vmatpush1.xpose.msra.mxu0 0.0
  %1018 = vmatprep.subr.mxu0 0.0
  %1019 = vmatpush1.xpose.msra.mxu0 0.0
  %1020 = vmatprep.subr.mxu0 0.0
  %1021 = vmatpush1.xpose.msra.mxu0 0.0
  %1022 = vmatprep.subr.mxu0 0.0
  %1023 = vmatpush1.xpose.msra.mxu0 0.0
  %1024 = vmatprep.mubr.f32.mxu0 0.0
  %1025 = vmatmul.mubr.f32.gmra.mrb[0].mxu0 %v954
  %v1026 = vpop.f32.mrb[0].mxu0
  %v1027 = vadd.f32 0.0, %v1026
  %v1028 = vpop.f32.mrb[0].mxu0
  %1029 = vdwg.mxu0
  %v1030 = vlaneseq
  %v1031 = vshrl.u32 %v1030, 7
  %v1032 = vsub.s32 0, %v1031
  %v1033 = vrot.slane %v1027, %v1032
  %v1034 = vadd.f32 %v941, %v1033
  %v1035 = vadd.f32 %v944, %v1033
  %v1036 = vmul.f32 %v929, 2.0
  %v1037 = vmul.f32 %v934, 2.0
  %v1038 = vsub.f32 %v1034, %v1036
  %v1039 = vsub.f32 %v1035, %v1037
  %v1040 = vmax.f32 %v1038, 0.0
  %v1041 = vmax.f32 %v1039, 0.0
  %v1042 = vrsqrt.pop %v1040
  %v1043 = vmul.f32 %v1040, %v1042
  %vm1044 = vcmp.eq.f32.partialorder %v1040, inf
  %v1045 = vsel %vm1044, %v1040, %v1043
  %vm1046 = vcmp.eq.f32.partialorder %v1040, 0.0
  %v1047 = vand.u32 %v1040, 2147483648
  %v1048 = vsel %vm1046, %v1047, %v1045
  %v1049 = vrsqrt.pop %v1041
  %v1050 = vmul.f32 %v1041, %v1049
  %vm1051 = vcmp.eq.f32.partialorder %v1041, inf
  %v1052 = vsel %vm1051, %v1041, %v1050
  %vm1053 = vcmp.eq.f32.partialorder %v1041, 0.0
  %v1054 = vand.u32 %v1041, 2147483648
  %v1055 = vsel %vm1053, %v1054, %v1052
  %v1056 = vadd.f32 %v1048, 1.0
  %v1057 = vadd.f32 %v1055, 1.0
  %v1058 = vrcp.pop %v1056
  %v1059 = vrcp.pop %v1057
  %v1060 = vsel %vm851, %v1058, 0.0
  %1061 = vadd.xlane.f32.xlu0 %v1060
  %v1062 = vpop.xlane.xlu0 %1061
  %v1063 = vsel %vm851, %v1059, 0.0
  %1064 = vadd.xlane.f32.xlu0 %v1063
  %v1065 = vpop.xlane.xlu0 %1064
  %1066 = vxpose.xlu0.b32.start [1/16] %v1058, 128
  %1067 = vxpose.xlu0.b32.cont [2/16] %v1059, 128
  %1068 = vxpose.xlu0.b32.cont [3/16] 0.0, 128
  %1069 = vxpose.xlu0.b32.cont [4/16] 0.0, 128
  %1070 = vxpose.xlu0.b32.cont [5/16] 0.0, 128
  %1071 = vxpose.xlu0.b32.cont [6/16] 0.0, 128
  %1072 = vxpose.xlu0.b32.cont [7/16] 0.0, 128
  %1073 = vxpose.xlu0.b32.cont [8/16] 0.0, 128
  %1074 = vxpose.xlu0.b32.cont [9/16] 0.0, 128
  %1075 = vxpose.xlu0.b32.cont [10/16] 0.0, 128
  %1076 = vxpose.xlu0.b32.cont [11/16] 0.0, 128
  %1077 = vxpose.xlu0.b32.cont [12/16] 0.0, 128
  %1078 = vxpose.xlu0.b32.cont [13/16] 0.0, 128
  %1079 = vxpose.xlu0.b32.cont [14/16] 0.0, 128
  %1080 = vxpose.xlu0.b32.cont [15/16] 0.0, 128
  %1081 = vxpose.xlu0.b32.end [16/16] 0.0, 128
  %v1082 = vpop.trf.xlu0
  %v1083 = vpop.trf.xlu0
  %v1084 = vpop.trf.xlu0
  %v1085 = vpop.trf.xlu0
  %v1086 = vpop.trf.xlu0
  %v1087 = vpop.trf.xlu0
  %v1088 = vpop.trf.xlu0
  %v1089 = vpop.trf.xlu0
  %v1090 = vpop.trf.xlu0
  %v1091 = vpop.trf.xlu0
  %v1092 = vpop.trf.xlu0
  %v1093 = vpop.trf.xlu0
  %v1094 = vpop.trf.xlu0
  %v1095 = vpop.trf.xlu0
  %v1096 = vpop.trf.xlu0
  %v1097 = vpop.trf.xlu0
  %v1099 = vsel %vm851, %v1082, 0
  %v1102 = vsel %vm851, %v1083, 0
  %1104 = vmatprep.subr.mxu0 0.0
  %1105 = vmatpush1.msra.mxu0 1.0
  %1106 = vmatprep.subr.mxu0 0.0
  %1107 = vmatpush1.msra.mxu0 1.0
  %1108 = vmatprep.subr.mxu0 0.0
  %1109 = vmatpush1.msra.mxu0 0.0
  %1110 = vmatprep.subr.mxu0 0.0
  %1111 = vmatpush1.msra.mxu0 0.0
  %1112 = vmatprep.subr.mxu0 0.0
  %1113 = vmatpush1.msra.mxu0 0.0
  %1114 = vmatprep.subr.mxu0 0.0
  %1115 = vmatpush1.msra.mxu0 0.0
  %1116 = vmatprep.subr.mxu0 0.0
  %1117 = vmatpush1.msra.mxu0 0.0
  %1118 = vmatprep.subr.mxu0 0.0
  %1119 = vmatpush1.msra.mxu0 0.0
  %1120 = vmatprep.subr.mxu0 0.0
  %1121 = vmatpush1.msra.mxu0 0.0
  %1122 = vmatprep.subr.mxu0 0.0
  %1123 = vmatpush1.msra.mxu0 0.0
  %1124 = vmatprep.subr.mxu0 0.0
  %1125 = vmatpush1.msra.mxu0 0.0
  %1126 = vmatprep.subr.mxu0 0.0
  %1127 = vmatpush1.msra.mxu0 0.0
  %1128 = vmatprep.subr.mxu0 0.0
  %1129 = vmatpush1.msra.mxu0 0.0
  %1130 = vmatprep.subr.mxu0 0.0
  %1131 = vmatpush1.msra.mxu0 0.0
  %1132 = vmatprep.subr.mxu0 0.0
  %1133 = vmatpush1.msra.mxu0 0.0
  %1134 = vmatprep.subr.mxu0 0.0
  %1135 = vmatpush1.msra.mxu0 0.0
  %1136 = vmatprep.subr.mxu0 0.0
  %1137 = vmatpush1.msra.mxu0 0.0
  %1138 = vmatprep.subr.mxu0 0.0
  %1139 = vmatpush1.msra.mxu0 0.0
  %1140 = vmatprep.subr.mxu0 0.0
  %1141 = vmatpush1.msra.mxu0 0.0
  %1142 = vmatprep.subr.mxu0 0.0
  %1143 = vmatpush1.msra.mxu0 0.0
  %1144 = vmatprep.subr.mxu0 0.0
  %1145 = vmatpush1.msra.mxu0 0.0
  %1146 = vmatprep.subr.mxu0 0.0
  %1147 = vmatpush1.msra.mxu0 0.0
  %1148 = vmatprep.subr.mxu0 0.0
  %1149 = vmatpush1.msra.mxu0 0.0
  %1150 = vmatprep.subr.mxu0 0.0
  %1151 = vmatpush1.msra.mxu0 0.0
  %1152 = vmatprep.subr.mxu0 0.0
  %1153 = vmatpush1.msra.mxu0 0.0
  %1154 = vmatprep.subr.mxu0 0.0
  %1155 = vmatpush1.msra.mxu0 0.0
  %1156 = vmatprep.subr.mxu0 0.0
  %1157 = vmatpush1.msra.mxu0 0.0
  %1158 = vmatprep.subr.mxu0 0.0
  %1159 = vmatpush1.msra.mxu0 0.0
  %1160 = vmatprep.subr.mxu0 0.0
  %1161 = vmatpush1.msra.mxu0 0.0
  %1162 = vmatprep.subr.mxu0 0.0
  %1163 = vmatpush1.msra.mxu0 0.0
  %1164 = vmatprep.subr.mxu0 0.0
  %1165 = vmatpush1.msra.mxu0 0.0
  %1166 = vmatprep.subr.mxu0 0.0
  %1167 = vmatpush1.msra.mxu0 0.0
  %1168 = vmatprep.mubr.f32.mxu0 0.0
  %1169 = vmatmul.mubr.f32.gmra.mrb[0].mxu0 %v1099
  %v1170 = vpop.f32.mrb[0].mxu0
  %v1171 = vadd.f32 0.0, %v1170
  %v1172 = vpop.f32.mrb[0].mxu0
  %1173 = vmatprep.mubr.f32.mxu0 0.0
  %1174 = vmatmul.mubr.f32.gmra.mrb[0].mxu0 %v1102
  %v1175 = vpop.f32.mrb[0].mxu0
  %v1176 = vadd.f32 0.0, %v1175
  %v1177 = vpop.f32.mrb[0].mxu0
  %1178 = vdwg.mxu0
  %1181 = vrot.lane.b32.xlu0 %v832, 112
  %v1182 = vpop.permute.xlu0 %1181
  %1183 = vrot.lane.b32.xlu0 %v837, 112
  %v1184 = vpop.permute.xlu0 %1183
  %v1186 = vsel %vm851, %v802, 0
  %v1189 = vsel %vm851, %v807, 0
  %v1191 = vsel %vm851, %v1182, 0
  %v1193 = vsel %vm851, %v1184, 0
  %1195 = vmatprep.subr.mxu0 0.0
  %1196 = vmatpush1.xpose.msra.mxu0 %v1191
  %1197 = vmatprep.subr.mxu0 0.0
  %1198 = vmatpush1.xpose.msra.mxu0 %v1193
  %1199 = vmatprep.subr.mxu0 0.0
  %1200 = vmatpush1.xpose.msra.mxu0 0.0
  %1201 = vmatprep.subr.mxu0 0.0
  %1202 = vmatpush1.xpose.msra.mxu0 0.0
  %1203 = vmatprep.subr.mxu0 0.0
  %1204 = vmatpush1.xpose.msra.mxu0 0.0
  %1205 = vmatprep.subr.mxu0 0.0
  %1206 = vmatpush1.xpose.msra.mxu0 0.0
  %1207 = vmatprep.subr.mxu0 0.0
  %1208 = vmatpush1.xpose.msra.mxu0 0.0
  %1209 = vmatprep.subr.mxu0 0.0
  %1210 = vmatpush1.xpose.msra.mxu0 0.0
  %1211 = vmatprep.subr.mxu0 0.0
  %1212 = vmatpush1.xpose.msra.mxu0 0.0
  %1213 = vmatprep.subr.mxu0 0.0
  %1214 = vmatpush1.xpose.msra.mxu0 0.0
  %1215 = vmatprep.subr.mxu0 0.0
  %1216 = vmatpush1.xpose.msra.mxu0 0.0
  %1217 = vmatprep.subr.mxu0 0.0
  %1218 = vmatpush1.xpose.msra.mxu0 0.0
  %1219 = vmatprep.subr.mxu0 0.0
  %1220 = vmatpush1.xpose.msra.mxu0 0.0
  %1221 = vmatprep.subr.mxu0 0.0
  %1222 = vmatpush1.xpose.msra.mxu0 0.0
  %1223 = vmatprep.subr.mxu0 0.0
  %1224 = vmatpush1.xpose.msra.mxu0 0.0
  %1225 = vmatprep.subr.mxu0 0.0
  %1226 = vmatpush1.xpose.msra.mxu0 0.0
  %1227 = vmatprep.subr.mxu0 0.0
  %1228 = vmatpush1.xpose.msra.mxu0 0.0
  %1229 = vmatprep.subr.mxu0 0.0
  %1230 = vmatpush1.xpose.msra.mxu0 0.0
  %1231 = vmatprep.subr.mxu0 0.0
  %1232 = vmatpush1.xpose.msra.mxu0 0.0
  %1233 = vmatprep.subr.mxu0 0.0
  %1234 = vmatpush1.xpose.msra.mxu0 0.0
  %1235 = vmatprep.subr.mxu0 0.0
  %1236 = vmatpush1.xpose.msra.mxu0 0.0
  %1237 = vmatprep.subr.mxu0 0.0
  %1238 = vmatpush1.xpose.msra.mxu0 0.0
  %1239 = vmatprep.subr.mxu0 0.0
  %1240 = vmatpush1.xpose.msra.mxu0 0.0
  %1241 = vmatprep.subr.mxu0 0.0
  %1242 = vmatpush1.xpose.msra.mxu0 0.0
  %1243 = vmatprep.subr.mxu0 0.0
  %1244 = vmatpush1.xpose.msra.mxu0 0.0
  %1245 = vmatprep.subr.mxu0 0.0
  %1246 = vmatpush1.xpose.msra.mxu0 0.0
  %1247 = vmatprep.subr.mxu0 0.0
  %1248 = vmatpush1.xpose.msra.mxu0 0.0
  %1249 = vmatprep.subr.mxu0 0.0
  %1250 = vmatpush1.xpose.msra.mxu0 0.0
  %1251 = vmatprep.subr.mxu0 0.0
  %1252 = vmatpush1.xpose.msra.mxu0 0.0
  %1253 = vmatprep.subr.mxu0 0.0
  %1254 = vmatpush1.xpose.msra.mxu0 0.0
  %1255 = vmatprep.subr.mxu0 0.0
  %1256 = vmatpush1.xpose.msra.mxu0 0.0
  %1257 = vmatprep.subr.mxu0 0.0
  %1258 = vmatpush1.xpose.msra.mxu0 0.0
  %1259 = vmatprep.mubr.f32.mxu0 0.0
  %1260 = vmatmul.mubr.f32.gmra.mrb[0].mxu0 %v1186
  %v1261 = vpop.f32.mrb[0].mxu0
  %v1262 = vadd.f32 0.0, %v1261
  %v1263 = vpop.f32.mrb[0].mxu0
  %1264 = vmatprep.mubr.f32.mxu0 0.0
  %1265 = vmatmul.mubr.f32.gmra.mrb[0].mxu0 %v1189
  %v1266 = vpop.f32.mrb[0].mxu0
  %v1267 = vadd.f32 0.0, %v1266
  %v1268 = vpop.f32.mrb[0].mxu0
  %1269 = vdwg.mxu0
  %v1270 = vmul.f32 %v802, %v802
  %v1271 = vmul.f32 %v807, %v807
  %v1272 = vsel %vm851, %v1270, 0.0
  %1273 = vadd.xlane.f32.xlu0 %v1272
  %v1274 = vpop.xlane.xlu0 %1273
  %v1275 = vsel %vm851, %v1271, 0.0
  %1276 = vadd.xlane.f32.xlu0 %v1275
  %v1277 = vpop.xlane.xlu0 %1276
  %v1278 = vmul.f32 %v832, %v832
  %v1279 = vmul.f32 %v837, %v837
  %1282 = vrot.lane.b32.xlu0 %v1278, 112
  %v1283 = vpop.permute.xlu0 %1282
  %1284 = vrot.lane.b32.xlu0 %v1279, 112
  %v1285 = vpop.permute.xlu0 %1284
  %v1286 = vsel %vm851, %v1283, 0
  %v1288 = vsel %vm851, %v1285, 0
  %1290 = vmatprep.subr.mxu0 0.0
  %1291 = vmatpush1.xpose.msra.mxu0 %v1286
  %1292 = vmatprep.subr.mxu0 0.0
  %1293 = vmatpush1.xpose.msra.mxu0 %v1288
  %1294 = vmatprep.subr.mxu0 0.0
  %1295 = vmatpush1.xpose.msra.mxu0 0.0
  %1296 = vmatprep.subr.mxu0 0.0
  %1297 = vmatpush1.xpose.msra.mxu0 0.0
  %1298 = vmatprep.subr.mxu0 0.0
  %1299 = vmatpush1.xpose.msra.mxu0 0.0
  %1300 = vmatprep.subr.mxu0 0.0
  %1301 = vmatpush1.xpose.msra.mxu0 0.0
  %1302 = vmatprep.subr.mxu0 0.0
  %1303 = vmatpush1.xpose.msra.mxu0 0.0
  %1304 = vmatprep.subr.mxu0 0.0
  %1305 = vmatpush1.xpose.msra.mxu0 0.0
  %1306 = vmatprep.subr.mxu0 0.0
  %1307 = vmatpush1.xpose.msra.mxu0 0.0
  %1308 = vmatprep.subr.mxu0 0.0
  %1309 = vmatpush1.xpose.msra.mxu0 0.0
  %1310 = vmatprep.subr.mxu0 0.0
  %1311 = vmatpush1.xpose.msra.mxu0 0.0
  %1312 = vmatprep.subr.mxu0 0.0
  %1313 = vmatpush1.xpose.msra.mxu0 0.0
  %1314 = vmatprep.subr.mxu0 0.0
  %1315 = vmatpush1.xpose.msra.mxu0 0.0
  %1316 = vmatprep.subr.mxu0 0.0
  %1317 = vmatpush1.xpose.msra.mxu0 0.0
  %1318 = vmatprep.subr.mxu0 0.0
  %1319 = vmatpush1.xpose.msra.mxu0 0.0
  %1320 = vmatprep.subr.mxu0 0.0
  %1321 = vmatpush1.xpose.msra.mxu0 0.0
  %1322 = vmatprep.subr.mxu0 0.0
  %1323 = vmatpush1.xpose.msra.mxu0 0.0
  %1324 = vmatprep.subr.mxu0 0.0
  %1325 = vmatpush1.xpose.msra.mxu0 0.0
  %1326 = vmatprep.subr.mxu0 0.0
  %1327 = vmatpush1.xpose.msra.mxu0 0.0
  %1328 = vmatprep.subr.mxu0 0.0
  %1329 = vmatpush1.xpose.msra.mxu0 0.0
  %1330 = vmatprep.subr.mxu0 0.0
  %1331 = vmatpush1.xpose.msra.mxu0 0.0
  %1332 = vmatprep.subr.mxu0 0.0
  %1333 = vmatpush1.xpose.msra.mxu0 0.0
  %1334 = vmatprep.subr.mxu0 0.0
  %1335 = vmatpush1.xpose.msra.mxu0 0.0
  %1336 = vmatprep.subr.mxu0 0.0
  %1337 = vmatpush1.xpose.msra.mxu0 0.0
  %1338 = vmatprep.subr.mxu0 0.0
  %1339 = vmatpush1.xpose.msra.mxu0 0.0
  %1340 = vmatprep.subr.mxu0 0.0
  %1341 = vmatpush1.xpose.msra.mxu0 0.0
  %1342 = vmatprep.subr.mxu0 0.0
  %1343 = vmatpush1.xpose.msra.mxu0 0.0
  %1344 = vmatprep.subr.mxu0 0.0
  %1345 = vmatpush1.xpose.msra.mxu0 0.0
  %1346 = vmatprep.subr.mxu0 0.0
  %1347 = vmatpush1.xpose.msra.mxu0 0.0
  %1348 = vmatprep.subr.mxu0 0.0
  %1349 = vmatpush1.xpose.msra.mxu0 0.0
  %1350 = vmatprep.subr.mxu0 0.0
  %1351 = vmatpush1.xpose.msra.mxu0 0.0
  %1352 = vmatprep.subr.mxu0 0.0
  %1353 = vmatpush1.xpose.msra.mxu0 0.0
  %1354 = vmatprep.mubr.f32.mxu0 0.0
  %1355 = vmatmul.mubr.f32.gmra.mrb[0].mxu0 %v954
  %v1356 = vpop.f32.mrb[0].mxu0
  %v1357 = vadd.f32 0.0, %v1356
  %v1358 = vpop.f32.mrb[0].mxu0
  %1359 = vdwg.mxu0
  %v1360 = vlaneseq
  %v1361 = vshrl.u32 %v1360, 7
  %v1362 = vsub.s32 0, %v1361
  %v1363 = vrot.slane %v1357, %v1362
  %v1364 = vadd.f32 %v1274, %v1363
  %v1365 = vadd.f32 %v1277, %v1363
  %v1366 = vmul.f32 %v1262, 2.0
  %v1367 = vmul.f32 %v1267, 2.0
  %v1368 = vsub.f32 %v1364, %v1366
  %v1369 = vsub.f32 %v1365, %v1367
  %v1370 = vmax.f32 %v1368, 0.0
  %v1371 = vmax.f32 %v1369, 0.0
  %v1372 = vrsqrt.pop %v1370
  %v1373 = vmul.f32 %v1370, %v1372
  %vm1374 = vcmp.eq.f32.partialorder %v1370, inf
  %v1375 = vsel %vm1374, %v1370, %v1373
  %vm1376 = vcmp.eq.f32.partialorder %v1370, 0.0
  %v1377 = vand.u32 %v1370, 2147483648
  %v1378 = vsel %vm1376, %v1377, %v1375
  %v1379 = vrsqrt.pop %v1371
  %v1380 = vmul.f32 %v1371, %v1379
  %vm1381 = vcmp.eq.f32.partialorder %v1371, inf
  %v1382 = vsel %vm1381, %v1371, %v1380
  %vm1383 = vcmp.eq.f32.partialorder %v1371, 0.0
  %v1384 = vand.u32 %v1371, 2147483648
  %v1385 = vsel %vm1383, %v1384, %v1382
  %v1386 = vadd.f32 %v1378, 1.0
  %v1387 = vadd.f32 %v1385, 1.0
  %v1388 = vrcp.pop %v1386
  %v1389 = vrcp.pop %v1387
  %v1390 = vsel %vm851, %v1388, 0.0
  %1391 = vadd.xlane.f32.xlu0 %v1390
  %v1392 = vpop.xlane.xlu0 %1391
  %v1393 = vsel %vm851, %v1389, 0.0
  %1394 = vadd.xlane.f32.xlu0 %v1393
  %v1395 = vpop.xlane.xlu0 %1394
  %1396 = vxpose.xlu0.b32.start [1/16] %v1388, 128
  %1397 = vxpose.xlu0.b32.cont [2/16] %v1389, 128
  %1398 = vxpose.xlu0.b32.cont [3/16] 0.0, 128
  %1399 = vxpose.xlu0.b32.cont [4/16] 0.0, 128
  %1400 = vxpose.xlu0.b32.cont [5/16] 0.0, 128
  %1401 = vxpose.xlu0.b32.cont [6/16] 0.0, 128
  %1402 = vxpose.xlu0.b32.cont [7/16] 0.0, 128
  %1403 = vxpose.xlu0.b32.cont [8/16] 0.0, 128
  %1404 = vxpose.xlu0.b32.cont [9/16] 0.0, 128
  %1405 = vxpose.xlu0.b32.cont [10/16] 0.0, 128
  %1406 = vxpose.xlu0.b32.cont [11/16] 0.0, 128
  %1407 = vxpose.xlu0.b32.cont [12/16] 0.0, 128
  %1408 = vxpose.xlu0.b32.cont [13/16] 0.0, 128
  %1409 = vxpose.xlu0.b32.cont [14/16] 0.0, 128
  %1410 = vxpose.xlu0.b32.cont [15/16] 0.0, 128
  %1411 = vxpose.xlu0.b32.end [16/16] 0.0, 128
  %v1412 = vpop.trf.xlu0
  %v1413 = vpop.trf.xlu0
  %v1414 = vpop.trf.xlu0
  %v1415 = vpop.trf.xlu0
  %v1416 = vpop.trf.xlu0
  %v1417 = vpop.trf.xlu0
  %v1418 = vpop.trf.xlu0
  %v1419 = vpop.trf.xlu0
  %v1420 = vpop.trf.xlu0
  %v1421 = vpop.trf.xlu0
  %v1422 = vpop.trf.xlu0
  %v1423 = vpop.trf.xlu0
  %v1424 = vpop.trf.xlu0
  %v1425 = vpop.trf.xlu0
  %v1426 = vpop.trf.xlu0
  %v1427 = vpop.trf.xlu0
  %v1429 = vsel %vm851, %v1412, 0
  %v1432 = vsel %vm851, %v1413, 0
  %1434 = vmatprep.subr.mxu0 0.0
  %1435 = vmatpush1.msra.mxu0 1.0
  %1436 = vmatprep.subr.mxu0 0.0
  %1437 = vmatpush1.msra.mxu0 1.0
  %1438 = vmatprep.subr.mxu0 0.0
  %1439 = vmatpush1.msra.mxu0 0.0
  %1440 = vmatprep.subr.mxu0 0.0
  %1441 = vmatpush1.msra.mxu0 0.0
  %1442 = vmatprep.subr.mxu0 0.0
  %1443 = vmatpush1.msra.mxu0 0.0
  %1444 = vmatprep.subr.mxu0 0.0
  %1445 = vmatpush1.msra.mxu0 0.0
  %1446 = vmatprep.subr.mxu0 0.0
  %1447 = vmatpush1.msra.mxu0 0.0
  %1448 = vmatprep.subr.mxu0 0.0
  %1449 = vmatpush1.msra.mxu0 0.0
  %1450 = vmatprep.subr.mxu0 0.0
  %1451 = vmatpush1.msra.mxu0 0.0
  %1452 = vmatprep.subr.mxu0 0.0
  %1453 = vmatpush1.msra.mxu0 0.0
  %1454 = vmatprep.subr.mxu0 0.0
  %1455 = vmatpush1.msra.mxu0 0.0
  %1456 = vmatprep.subr.mxu0 0.0
  %1457 = vmatpush1.msra.mxu0 0.0
  %1458 = vmatprep.subr.mxu0 0.0
  %1459 = vmatpush1.msra.mxu0 0.0
  %1460 = vmatprep.subr.mxu0 0.0
  %1461 = vmatpush1.msra.mxu0 0.0
  %1462 = vmatprep.subr.mxu0 0.0
  %1463 = vmatpush1.msra.mxu0 0.0
  %1464 = vmatprep.subr.mxu0 0.0
  %1465 = vmatpush1.msra.mxu0 0.0
  %1466 = vmatprep.subr.mxu0 0.0
  %1467 = vmatpush1.msra.mxu0 0.0
  %1468 = vmatprep.subr.mxu0 0.0
  %1469 = vmatpush1.msra.mxu0 0.0
  %1470 = vmatprep.subr.mxu0 0.0
  %1471 = vmatpush1.msra.mxu0 0.0
  %1472 = vmatprep.subr.mxu0 0.0
  %1473 = vmatpush1.msra.mxu0 0.0
  %1474 = vmatprep.subr.mxu0 0.0
  %1475 = vmatpush1.msra.mxu0 0.0
  %1476 = vmatprep.subr.mxu0 0.0
  %1477 = vmatpush1.msra.mxu0 0.0
  %1478 = vmatprep.subr.mxu0 0.0
  %1479 = vmatpush1.msra.mxu0 0.0
  %1480 = vmatprep.subr.mxu0 0.0
  %1481 = vmatpush1.msra.mxu0 0.0
  %1482 = vmatprep.subr.mxu0 0.0
  %1483 = vmatpush1.msra.mxu0 0.0
  %1484 = vmatprep.subr.mxu0 0.0
  %1485 = vmatpush1.msra.mxu0 0.0
  %1486 = vmatprep.subr.mxu0 0.0
  %1487 = vmatpush1.msra.mxu0 0.0
  %1488 = vmatprep.subr.mxu0 0.0
  %1489 = vmatpush1.msra.mxu0 0.0
  %1490 = vmatprep.subr.mxu0 0.0
  %1491 = vmatpush1.msra.mxu0 0.0
  %1492 = vmatprep.subr.mxu0 0.0
  %1493 = vmatpush1.msra.mxu0 0.0
  %1494 = vmatprep.subr.mxu0 0.0
  %1495 = vmatpush1.msra.mxu0 0.0
  %1496 = vmatprep.subr.mxu0 0.0
  %1497 = vmatpush1.msra.mxu0 0.0
  %1498 = vmatprep.mubr.f32.mxu0 0.0
  %1499 = vmatmul.mubr.f32.gmra.mrb[0].mxu0 %v1429
  %v1500 = vpop.f32.mrb[0].mxu0
  %v1501 = vadd.f32 0.0, %v1500
  %v1502 = vpop.f32.mrb[0].mxu0
  %1503 = vmatprep.mubr.f32.mxu0 0.0
  %1504 = vmatmul.mubr.f32.gmra.mrb[0].mxu0 %v1432
  %v1505 = vpop.f32.mrb[0].mxu0
  %v1506 = vadd.f32 0.0, %v1505
  %v1507 = vpop.f32.mrb[0].mxu0
  %1508 = vdwg.mxu0
  %1510 = vset.pattern.permute.xlu0 0
  %1511 = vperm.xlu0 %1510, %v1062
  %v1512 = vpop.permute.xlu0 %1511
  %1515 = vset.pattern.permute.xlu0 0
  %1516 = vperm.xlu0 %1515, %v1065
  %v1517 = vpop.permute.xlu0 %1516
  %1520 = vset.pattern.permute.xlu0 0
  %1521 = vperm.xlu0 %1520, 0.0
  %v1522 = vpop.permute.xlu0 %1521
  %1525 = vset.pattern.permute.xlu0 0
  %1526 = vperm.xlu0 %1525, %v1392
  %v1527 = vpop.permute.xlu0 %1526
  %1530 = vset.pattern.permute.xlu0 0
  %1531 = vperm.xlu0 %1530, %v1395
  %v1532 = vpop.permute.xlu0 %1531
  %1535 = vset.pattern.permute.xlu0 0
  %1536 = vperm.xlu0 %1535, %v1171
  %v1537 = vpop.permute.xlu0 %1536
  %1540 = vset.pattern.permute.xlu0 0
  %1541 = vperm.xlu0 %1540, %v1176
  %v1542 = vpop.permute.xlu0 %1541
  %1545 = vset.pattern.permute.xlu0 0
  %1546 = vperm.xlu0 %1545, %v1501
  %v1547 = vpop.permute.xlu0 %1546
  %1550 = vset.pattern.permute.xlu0 0
  %1551 = vperm.xlu0 %1550, %v1506
  %v1552 = vpop.permute.xlu0 %1551
  %v1554 = vmul.f32 %v787, %v1512
  %v1555 = vmul.f32 %v792, %v1517
  %v1556 = vmul.f32 %v797, %v1522
  %v1557 = vmul.f32 %v802, %v1527
  %v1558 = vmul.f32 %v807, %v1532
  %v1559 = vmul.f32 %v812, %v1522
  %v1560 = vmul.f32 %v817, %v1537
  %v1561 = vmul.f32 %v822, %v1542
  %v1562 = vmul.f32 %v827, %v1522
  %v1563 = vmul.f32 %v832, %v1547
  %v1564 = vmul.f32 %v837, %v1552
  %v1565 = vmul.f32 %v842, %v1522
  %v1566 = vld [vmem:[%s2] sm:$0xf]
  %v1568 = vsel %vm71, %v1566, 0
  %1570 = vmatprep.subr.mxu0 0.0
  %1571 = vmatpush1.msra.mxu0 %v1554
  %1572 = vmatprep.subr.mxu0 0.0
  %1573 = vmatpush1.msra.mxu0 %v1555
  %1574 = vmatprep.subr.mxu0 0.0
  %1575 = vmatpush1.msra.mxu0 %v1556
  %1576 = vmatprep.subr.mxu0 0.0
  %1577 = vmatpush1.msra.mxu0 %v1557
  %1578 = vmatprep.subr.mxu0 0.0
  %1579 = vmatpush1.msra.mxu0 %v1558
  %1580 = vmatprep.subr.mxu0 0.0
  %1581 = vmatpush1.msra.mxu0 %v1559
  %1582 = vmatprep.subr.mxu0 0.0
  %1583 = vmatpush1.msra.mxu0 %v1560
  %1584 = vmatprep.subr.mxu0 0.0
  %1585 = vmatpush1.msra.mxu0 %v1561
  %1586 = vmatprep.subr.mxu0 0.0
  %1587 = vmatpush1.msra.mxu0 %v1562
  %1588 = vmatprep.subr.mxu0 0.0
  %1589 = vmatpush1.msra.mxu0 %v1563
  %1590 = vmatprep.subr.mxu0 0.0
  %1591 = vmatpush1.msra.mxu0 %v1564
  %1592 = vmatprep.subr.mxu0 0.0
  %1593 = vmatpush1.msra.mxu0 %v1565
  %1594 = vmatprep.subr.mxu0 0.0
  %1595 = vmatpush1.msra.mxu0 0.0
  %1596 = vmatprep.subr.mxu0 0.0
  %1597 = vmatpush1.msra.mxu0 0.0
  %1598 = vmatprep.subr.mxu0 0.0
  %1599 = vmatpush1.msra.mxu0 0.0
  %1600 = vmatprep.subr.mxu0 0.0
  %1601 = vmatpush1.msra.mxu0 0.0
  %1602 = vmatprep.subr.mxu0 0.0
  %1603 = vmatpush1.msra.mxu0 0.0
  %1604 = vmatprep.subr.mxu0 0.0
  %1605 = vmatpush1.msra.mxu0 0.0
  %1606 = vmatprep.subr.mxu0 0.0
  %1607 = vmatpush1.msra.mxu0 0.0
  %1608 = vmatprep.subr.mxu0 0.0
  %1609 = vmatpush1.msra.mxu0 0.0
  %1610 = vmatprep.subr.mxu0 0.0
  %1611 = vmatpush1.msra.mxu0 0.0
  %1612 = vmatprep.subr.mxu0 0.0
  %1613 = vmatpush1.msra.mxu0 0.0
  %1614 = vmatprep.subr.mxu0 0.0
  %1615 = vmatpush1.msra.mxu0 0.0
  %1616 = vmatprep.subr.mxu0 0.0
  %1617 = vmatpush1.msra.mxu0 0.0
  %1618 = vmatprep.subr.mxu0 0.0
  %1619 = vmatpush1.msra.mxu0 0.0
  %1620 = vmatprep.subr.mxu0 0.0
  %1621 = vmatpush1.msra.mxu0 0.0
  %1622 = vmatprep.subr.mxu0 0.0
  %1623 = vmatpush1.msra.mxu0 0.0
  %1624 = vmatprep.subr.mxu0 0.0
  %1625 = vmatpush1.msra.mxu0 0.0
  %1626 = vmatprep.subr.mxu0 0.0
  %1627 = vmatpush1.msra.mxu0 0.0
  %1628 = vmatprep.subr.mxu0 0.0
  %1629 = vmatpush1.msra.mxu0 0.0
  %1630 = vmatprep.subr.mxu0 0.0
  %1631 = vmatpush1.msra.mxu0 0.0
  %1632 = vmatprep.subr.mxu0 0.0
  %1633 = vmatpush1.msra.mxu0 0.0
  %1634 = vmatprep.mubr.f32.mxu0 0.0
  %1635 = vmatmul.mubr.f32.gmra.mrb[0].mxu0 %v1568
  %v1636 = vpop.f32.mrb[0].mxu0
  %v1637 = vadd.f32 0.0, %v1636
  %v1638 = vpop.f32.mrb[0].mxu0
  %1639 = vdwg.mxu0
  %s1640 = scalar_lea.vmem %s2, 4
  %v1641 = vld [vmem:[%s1640] sm:$0xf]
  %v1643 = vsel %vm71, %v1641, 0
  %1645 = vmatprep.subr.mxu0 0.0
  %1646 = vmatpush1.msra.mxu0 %v1554
  %1647 = vmatprep.subr.mxu0 0.0
  %1648 = vmatpush1.msra.mxu0 %v1555
  %1649 = vmatprep.subr.mxu0 0.0
  %1650 = vmatpush1.msra.mxu0 %v1556
  %1651 = vmatprep.subr.mxu0 0.0
  %1652 = vmatpush1.msra.mxu0 %v1557
  %1653 = vmatprep.subr.mxu0 0.0
  %1654 = vmatpush1.msra.mxu0 %v1558
  %1655 = vmatprep.subr.mxu0 0.0
  %1656 = vmatpush1.msra.mxu0 %v1559
  %1657 = vmatprep.subr.mxu0 0.0
  %1658 = vmatpush1.msra.mxu0 %v1560
  %1659 = vmatprep.subr.mxu0 0.0
  %1660 = vmatpush1.msra.mxu0 %v1561
  %1661 = vmatprep.subr.mxu0 0.0
  %1662 = vmatpush1.msra.mxu0 %v1562
  %1663 = vmatprep.subr.mxu0 0.0
  %1664 = vmatpush1.msra.mxu0 %v1563
  %1665 = vmatprep.subr.mxu0 0.0
  %1666 = vmatpush1.msra.mxu0 %v1564
  %1667 = vmatprep.subr.mxu0 0.0
  %1668 = vmatpush1.msra.mxu0 %v1565
  %1669 = vmatprep.subr.mxu0 0.0
  %1670 = vmatpush1.msra.mxu0 0.0
  %1671 = vmatprep.subr.mxu0 0.0
  %1672 = vmatpush1.msra.mxu0 0.0
  %1673 = vmatprep.subr.mxu0 0.0
  %1674 = vmatpush1.msra.mxu0 0.0
  %1675 = vmatprep.subr.mxu0 0.0
  %1676 = vmatpush1.msra.mxu0 0.0
  %1677 = vmatprep.subr.mxu0 0.0
  %1678 = vmatpush1.msra.mxu0 0.0
  %1679 = vmatprep.subr.mxu0 0.0
  %1680 = vmatpush1.msra.mxu0 0.0
  %1681 = vmatprep.subr.mxu0 0.0
  %1682 = vmatpush1.msra.mxu0 0.0
  %1683 = vmatprep.subr.mxu0 0.0
  %1684 = vmatpush1.msra.mxu0 0.0
  %1685 = vmatprep.subr.mxu0 0.0
  %1686 = vmatpush1.msra.mxu0 0.0
  %1687 = vmatprep.subr.mxu0 0.0
  %1688 = vmatpush1.msra.mxu0 0.0
  %1689 = vmatprep.subr.mxu0 0.0
  %1690 = vmatpush1.msra.mxu0 0.0
  %1691 = vmatprep.subr.mxu0 0.0
  %1692 = vmatpush1.msra.mxu0 0.0
  %1693 = vmatprep.subr.mxu0 0.0
  %1694 = vmatpush1.msra.mxu0 0.0
  %1695 = vmatprep.subr.mxu0 0.0
  %1696 = vmatpush1.msra.mxu0 0.0
  %1697 = vmatprep.subr.mxu0 0.0
  %1698 = vmatpush1.msra.mxu0 0.0
  %1699 = vmatprep.subr.mxu0 0.0
  %1700 = vmatpush1.msra.mxu0 0.0
  %1701 = vmatprep.subr.mxu0 0.0
  %1702 = vmatpush1.msra.mxu0 0.0
  %1703 = vmatprep.subr.mxu0 0.0
  %1704 = vmatpush1.msra.mxu0 0.0
  %1705 = vmatprep.subr.mxu0 0.0
  %1706 = vmatpush1.msra.mxu0 0.0
  %1707 = vmatprep.subr.mxu0 0.0
  %1708 = vmatpush1.msra.mxu0 0.0
  %1709 = vmatprep.mubr.f32.mxu0 0.0
  %1710 = vmatmul.mubr.f32.gmra.mrb[0].mxu0 %v1643
  %v1711 = vpop.f32.mrb[0].mxu0
  %v1712 = vadd.f32 0.0, %v1711
  %v1713 = vpop.f32.mrb[0].mxu0
  %1714 = vdwg.mxu0
  %s1715 = scalar_lea.vmem %s2, 8
  %v1716 = vld [vmem:[%s1715] sm:$0xf]
  %v1718 = vsel %vm71, %v1716, 0
  %1720 = vmatprep.subr.mxu0 0.0
  %1721 = vmatpush1.msra.mxu0 %v1554
  %1722 = vmatprep.subr.mxu0 0.0
  %1723 = vmatpush1.msra.mxu0 %v1555
  %1724 = vmatprep.subr.mxu0 0.0
  %1725 = vmatpush1.msra.mxu0 %v1556
  %1726 = vmatprep.subr.mxu0 0.0
  %1727 = vmatpush1.msra.mxu0 %v1557
  %1728 = vmatprep.subr.mxu0 0.0
  %1729 = vmatpush1.msra.mxu0 %v1558
  %1730 = vmatprep.subr.mxu0 0.0
  %1731 = vmatpush1.msra.mxu0 %v1559
  %1732 = vmatprep.subr.mxu0 0.0
  %1733 = vmatpush1.msra.mxu0 %v1560
  %1734 = vmatprep.subr.mxu0 0.0
  %1735 = vmatpush1.msra.mxu0 %v1561
  %1736 = vmatprep.subr.mxu0 0.0
  %1737 = vmatpush1.msra.mxu0 %v1562
  %1738 = vmatprep.subr.mxu0 0.0
  %1739 = vmatpush1.msra.mxu0 %v1563
  %1740 = vmatprep.subr.mxu0 0.0
  %1741 = vmatpush1.msra.mxu0 %v1564
  %1742 = vmatprep.subr.mxu0 0.0
  %1743 = vmatpush1.msra.mxu0 %v1565
  %1744 = vmatprep.subr.mxu0 0.0
  %1745 = vmatpush1.msra.mxu0 0.0
  %1746 = vmatprep.subr.mxu0 0.0
  %1747 = vmatpush1.msra.mxu0 0.0
  %1748 = vmatprep.subr.mxu0 0.0
  %1749 = vmatpush1.msra.mxu0 0.0
  %1750 = vmatprep.subr.mxu0 0.0
  %1751 = vmatpush1.msra.mxu0 0.0
  %1752 = vmatprep.subr.mxu0 0.0
  %1753 = vmatpush1.msra.mxu0 0.0
  %1754 = vmatprep.subr.mxu0 0.0
  %1755 = vmatpush1.msra.mxu0 0.0
  %1756 = vmatprep.subr.mxu0 0.0
  %1757 = vmatpush1.msra.mxu0 0.0
  %1758 = vmatprep.subr.mxu0 0.0
  %1759 = vmatpush1.msra.mxu0 0.0
  %1760 = vmatprep.subr.mxu0 0.0
  %1761 = vmatpush1.msra.mxu0 0.0
  %1762 = vmatprep.subr.mxu0 0.0
  %1763 = vmatpush1.msra.mxu0 0.0
  %1764 = vmatprep.subr.mxu0 0.0
  %1765 = vmatpush1.msra.mxu0 0.0
  %1766 = vmatprep.subr.mxu0 0.0
  %1767 = vmatpush1.msra.mxu0 0.0
  %1768 = vmatprep.subr.mxu0 0.0
  %1769 = vmatpush1.msra.mxu0 0.0
  %1770 = vmatprep.subr.mxu0 0.0
  %1771 = vmatpush1.msra.mxu0 0.0
  %1772 = vmatprep.subr.mxu0 0.0
  %1773 = vmatpush1.msra.mxu0 0.0
  %1774 = vmatprep.subr.mxu0 0.0
  %1775 = vmatpush1.msra.mxu0 0.0
  %1776 = vmatprep.subr.mxu0 0.0
  %1777 = vmatpush1.msra.mxu0 0.0
  %1778 = vmatprep.subr.mxu0 0.0
  %1779 = vmatpush1.msra.mxu0 0.0
  %1780 = vmatprep.subr.mxu0 0.0
  %1781 = vmatpush1.msra.mxu0 0.0
  %1782 = vmatprep.subr.mxu0 0.0
  %1783 = vmatpush1.msra.mxu0 0.0
  %1784 = vmatprep.mubr.f32.mxu0 0.0
  %1785 = vmatmul.mubr.f32.gmra.mrb[0].mxu0 %v1718
  %v1786 = vpop.f32.mrb[0].mxu0
  %v1787 = vadd.f32 0.0, %v1786
  %v1788 = vpop.f32.mrb[0].mxu0
  %1789 = vdwg.mxu0
  %1791 = vrot.lane.b32.xlu0 %v1712, 32
  %v1792 = vpop.permute.xlu0 %1791
  %1795 = vrot.lane.b32.xlu0 %v1787, 64
  %v1796 = vpop.permute.xlu0 %1795
  %v1798 = vsel %vm641, %v1637, %v1792
  %v1799 = vsel %vm654, %v1798, %v1796
  %v1800 = vld [vmem:[%s1 + $0x60] sm:$0xff]
  %v1801 = vld [vmem:[%s1 + $0x68] sm:$0xff]
  %v1802 = vld [vmem:[%s1 + $0x70] sm:$0xff]
  %v1803 = vld [vmem:[%s1 + $0x78] sm:$0xff]
  %v1804 = vld [vmem:[%s1 + $0x80] sm:$0xff]
  %v1805 = vld [vmem:[%s1 + $0x88] sm:$0xff]
  %v1806 = vld [vmem:[%s1 + $0x90] sm:$0xff]
  %v1807 = vld [vmem:[%s1 + $0x98] sm:$0xff]
  %v1808 = vld [vmem:[%s1 + $0xa0] sm:$0xff]
  %v1809 = vld [vmem:[%s1 + $0xa8] sm:$0xff]
  %v1810 = vld [vmem:[%s1 + $0xb0] sm:$0xff]
  %v1811 = vld [vmem:[%s1 + $0xb8] sm:$0xff]
  %v1812 = vld [vmem:[%s1 + $0x1c2] sm:$0x1]
  %v1814 = vsel %vm71, %v1799, 0
  %1816 = vmatprep.subr.mxu0 0.0
  %1817 = vmatpush1.msra.mxu0 %v1800
  %1818 = vmatprep.subr.mxu0 0.0
  %1819 = vmatpush1.msra.mxu0 %v1801
  %1820 = vmatprep.subr.mxu0 0.0
  %1821 = vmatpush1.msra.mxu0 %v1802
  %1822 = vmatprep.subr.mxu0 0.0
  %1823 = vmatpush1.msra.mxu0 %v1803
  %1824 = vmatprep.subr.mxu0 0.0
  %1825 = vmatpush1.msra.mxu0 %v1804
  %1826 = vmatprep.subr.mxu0 0.0
  %1827 = vmatpush1.msra.mxu0 %v1805
  %1828 = vmatprep.subr.mxu0 0.0
  %1829 = vmatpush1.msra.mxu0 %v1806
  %1830 = vmatprep.subr.mxu0 0.0
  %1831 = vmatpush1.msra.mxu0 %v1807
  %1832 = vmatprep.subr.mxu0 0.0
  %1833 = vmatpush1.msra.mxu0 %v1808
  %1834 = vmatprep.subr.mxu0 0.0
  %1835 = vmatpush1.msra.mxu0 %v1809
  %1836 = vmatprep.subr.mxu0 0.0
  %1837 = vmatpush1.msra.mxu0 %v1810
  %1838 = vmatprep.subr.mxu0 0.0
  %1839 = vmatpush1.msra.mxu0 %v1811
  %1840 = vmatprep.subr.mxu0 0.0
  %1841 = vmatpush1.msra.mxu0 0.0
  %1842 = vmatprep.subr.mxu0 0.0
  %1843 = vmatpush1.msra.mxu0 0.0
  %1844 = vmatprep.subr.mxu0 0.0
  %1845 = vmatpush1.msra.mxu0 0.0
  %1846 = vmatprep.subr.mxu0 0.0
  %1847 = vmatpush1.msra.mxu0 0.0
  %1848 = vmatprep.subr.mxu0 0.0
  %1849 = vmatpush1.msra.mxu0 0.0
  %1850 = vmatprep.subr.mxu0 0.0
  %1851 = vmatpush1.msra.mxu0 0.0
  %1852 = vmatprep.subr.mxu0 0.0
  %1853 = vmatpush1.msra.mxu0 0.0
  %1854 = vmatprep.subr.mxu0 0.0
  %1855 = vmatpush1.msra.mxu0 0.0
  %1856 = vmatprep.subr.mxu0 0.0
  %1857 = vmatpush1.msra.mxu0 0.0
  %1858 = vmatprep.subr.mxu0 0.0
  %1859 = vmatpush1.msra.mxu0 0.0
  %1860 = vmatprep.subr.mxu0 0.0
  %1861 = vmatpush1.msra.mxu0 0.0
  %1862 = vmatprep.subr.mxu0 0.0
  %1863 = vmatpush1.msra.mxu0 0.0
  %1864 = vmatprep.subr.mxu0 0.0
  %1865 = vmatpush1.msra.mxu0 0.0
  %1866 = vmatprep.subr.mxu0 0.0
  %1867 = vmatpush1.msra.mxu0 0.0
  %1868 = vmatprep.subr.mxu0 0.0
  %1869 = vmatpush1.msra.mxu0 0.0
  %1870 = vmatprep.subr.mxu0 0.0
  %1871 = vmatpush1.msra.mxu0 0.0
  %1872 = vmatprep.subr.mxu0 0.0
  %1873 = vmatpush1.msra.mxu0 0.0
  %1874 = vmatprep.subr.mxu0 0.0
  %1875 = vmatpush1.msra.mxu0 0.0
  %1876 = vmatprep.subr.mxu0 0.0
  %1877 = vmatpush1.msra.mxu0 0.0
  %1878 = vmatprep.subr.mxu0 0.0
  %1879 = vmatpush1.msra.mxu0 0.0
  %1880 = vmatprep.mubr.f32.mxu0 0.0
  %1881 = vmatmul.mubr.f32.gmra.mrb[0].mxu0 %v1814
  %v1882 = vpop.f32.mrb[0].mxu0
  %v1883 = vadd.f32 0.0, %v1882
  %v1884 = vpop.f32.mrb[0].mxu0
  %1885 = vdwg.mxu0
  %v1886 = vmul.f32 %v1883, 0.071428575
  %v1887 = vlaneseq
  %v1888 = vshrl.u32 %v1887, 7
  %v1889 = vsub.s32 0, %v1888
  %v1890 = vrot.slane %v1812, %v1889
  %v1891 = vadd.f32 %v1886, %v1890
  %v1892 = vld [vmem:[%s1 + $0xc0] sm:$0xff]
  %v1893 = vld [vmem:[%s1 + $0xc8] sm:$0xff]
  %v1894 = vld [vmem:[%s1 + $0xd0] sm:$0xff]
  %v1895 = vld [vmem:[%s1 + $0xd8] sm:$0xff]
  %v1896 = vld [vmem:[%s1 + $0x1c3] sm:$0x1]
  %v1897 = vlaneseq
  %v1898 = vshrl.u32 %v1897, 7
  %v1899 = vsub.s32 0, %v1898
  %v1900 = vrot.slane %v1896, %v1899
  %v1902 = vsel %vm641, %v1891, 0
  %1904 = vmatprep.subr.mxu0 0.0
  %1905 = vmatpush1.msra.mxu0 %v1892
  %1906 = vmatprep.subr.mxu0 0.0
  %1907 = vmatpush1.msra.mxu0 %v1893
  %1908 = vmatprep.subr.mxu0 0.0
  %1909 = vmatpush1.msra.mxu0 %v1894
  %1910 = vmatprep.subr.mxu0 0.0
  %1911 = vmatpush1.msra.mxu0 %v1895
  %1912 = vmatprep.subr.mxu0 0.0
  %1913 = vmatpush1.msra.mxu0 0.0
  %1914 = vmatprep.subr.mxu0 0.0
  %1915 = vmatpush1.msra.mxu0 0.0
  %1916 = vmatprep.subr.mxu0 0.0
  %1917 = vmatpush1.msra.mxu0 0.0
  %1918 = vmatprep.subr.mxu0 0.0
  %1919 = vmatpush1.msra.mxu0 0.0
  %1920 = vmatprep.subr.mxu0 0.0
  %1921 = vmatpush1.msra.mxu0 0.0
  %1922 = vmatprep.subr.mxu0 0.0
  %1923 = vmatpush1.msra.mxu0 0.0
  %1924 = vmatprep.subr.mxu0 0.0
  %1925 = vmatpush1.msra.mxu0 0.0
  %1926 = vmatprep.subr.mxu0 0.0
  %1927 = vmatpush1.msra.mxu0 0.0
  %1928 = vmatprep.subr.mxu0 0.0
  %1929 = vmatpush1.msra.mxu0 0.0
  %1930 = vmatprep.subr.mxu0 0.0
  %1931 = vmatpush1.msra.mxu0 0.0
  %1932 = vmatprep.subr.mxu0 0.0
  %1933 = vmatpush1.msra.mxu0 0.0
  %1934 = vmatprep.subr.mxu0 0.0
  %1935 = vmatpush1.msra.mxu0 0.0
  %1936 = vmatprep.subr.mxu0 0.0
  %1937 = vmatpush1.msra.mxu0 0.0
  %1938 = vmatprep.subr.mxu0 0.0
  %1939 = vmatpush1.msra.mxu0 0.0
  %1940 = vmatprep.subr.mxu0 0.0
  %1941 = vmatpush1.msra.mxu0 0.0
  %1942 = vmatprep.subr.mxu0 0.0
  %1943 = vmatpush1.msra.mxu0 0.0
  %1944 = vmatprep.subr.mxu0 0.0
  %1945 = vmatpush1.msra.mxu0 0.0
  %1946 = vmatprep.subr.mxu0 0.0
  %1947 = vmatpush1.msra.mxu0 0.0
  %1948 = vmatprep.subr.mxu0 0.0
  %1949 = vmatpush1.msra.mxu0 0.0
  %1950 = vmatprep.subr.mxu0 0.0
  %1951 = vmatpush1.msra.mxu0 0.0
  %1952 = vmatprep.subr.mxu0 0.0
  %1953 = vmatpush1.msra.mxu0 0.0
  %1954 = vmatprep.subr.mxu0 0.0
  %1955 = vmatpush1.msra.mxu0 0.0
  %1956 = vmatprep.subr.mxu0 0.0
  %1957 = vmatpush1.msra.mxu0 0.0
  %1958 = vmatprep.subr.mxu0 0.0
  %1959 = vmatpush1.msra.mxu0 0.0
  %1960 = vmatprep.subr.mxu0 0.0
  %1961 = vmatpush1.msra.mxu0 0.0
  %1962 = vmatprep.subr.mxu0 0.0
  %1963 = vmatpush1.msra.mxu0 0.0
  %1964 = vmatprep.subr.mxu0 0.0
  %1965 = vmatpush1.msra.mxu0 0.0
  %1966 = vmatprep.subr.mxu0 0.0
  %1967 = vmatpush1.msra.mxu0 0.0
  %1968 = vmatprep.mubr.f32.mxu0 0.0
  %1969 = vmatmul.mubr.f32.gmra.mrb[0].mxu0 %v1902
  %v1970 = vpop.f32.mrb[0].mxu0
  %v1971 = vadd.f32 %v1900, %v1970
  %v1972 = vpop.f32.mrb[0].mxu0
  %1973 = vdwg.mxu0
  %v1974 = vmax.f32 %v1971, 0.0
  %vm1975 = vcmask 125952
  %1976 = vst.msk [vmem:[%s3] sm:$0xf] %vm1975, %v1974
  // Predicated region
  $region14: #{daml_doc_features.1} parent=0 // pred_check
    _
  $region15: #{daml_doc_features.1} parent=0 // pred_check_branch
    %1978 = sbr.rel (0) target = $region17
  $region16: #{daml_doc_features.1} parent=0 // pred_region
    _
  $region17: #{daml_doc_features.1} parent=0 // pred_fallthru
    _
  // Predicated region
  $region18: #{daml_doc_features.1} parent=0 // pred_check
    _
  $region19: #{daml_doc_features.1} parent=0 // pred_check_branch
    %1980 = sbr.rel (0) target = $region21
  $region20: #{daml_doc_features.1} parent=0 // pred_region
    _
  $region21: #{daml_doc_features.1} parent=0 // pred_fallthru
    _

</llo_original>
